<compile_context>
chip_gen: v5e
topology: v5e:2x2
jax: 0.10.0
libtpu: 0.0.40
codegen_flags: <defaults>
</compile_context>

<pallas_src>
import math
import functools

import jax
import jax.numpy as jnp
from jax.experimental import pallas as pl
from jax.experimental.pallas import tpu as pltpu


def _gelu_exact(x):
    # torch.nn.GELU(approximate='none'): 0.5*x*(1+erf(x/sqrt(2)))
    return 0.5 * x * (1.0 + jax.lax.erf(x * (1.0 / math.sqrt(2.0))))


def _gelu_tanh(x):
    # torch.nn.GELU(approximate='tanh'); tanh routes to the EUP (otherwise idle VLIW slot).
    c = math.sqrt(2.0 / math.pi)
    return 0.5 * x * (1.0 + jnp.tanh(c * (x + 0.044715 * x * x * x)))


def _mlp_kernel(x_ref, w_in_ref, b_in_ref, w_h_ref, b_h_ref, w_out_ref, b_out_ref, o_ref,
                *, n_hidden, compute_dtype, gelu_approx):
    gelu = _gelu_tanh if gelu_approx else _gelu_exact
    is_f32 = (compute_dtype == jnp.float32)
    cast = (lambda a: a) if is_f32 else (lambda a: a.astype(compute_dtype))

    # Input layer, feature-major (lane-dense): W_in (H, in_dim) @ x (in_dim, tb) -> (H, tb).
    h = jnp.dot(w_in_ref[...], cast(x_ref[...]), preferred_element_type=jnp.float32)
    h = gelu(h + b_in_ref[...])                      # bias/GELU in f32, lane-dense

    for i in range(n_hidden):                        # static unroll (layers - 1 hidden Linears)
        h = jnp.dot(w_h_ref[i], cast(h), preferred_element_type=jnp.float32) + b_h_ref[i]
        h = gelu(h)

    # Output layer: W_out (out_dim, H) @ h (H, tb) -> (out_dim, tb); full-lane vst stores.
    y = jnp.dot(w_out_ref[...], cast(h), preferred_element_type=jnp.float32) + b_out_ref[...]
    o_ref[...] = y.astype(o_ref.dtype)


def init_langevin_scaling_params(key, s_emb_dim, t_dim, hidden_dim=64, layers=3,
                                 out_dim=1, zero_init=False):
    """PyTorch-default-style init (U(-1/sqrt(fan_in), .)), stored in kernel-ready layout:
    weights in PyTorch (out, in) layout, biases as (out, 1) columns (feature-major)."""
    in_dim = s_emb_dim + t_dim
    n_hidden = layers - 1
    assert n_hidden >= 1, "layers must be >= 2"

    def linear(k, fan_in, w_shape, b_shape):
        kw, kb = jax.random.split(k)
        bound = 1.0 / math.sqrt(fan_in)
        w = jax.random.uniform(kw, w_shape, jnp.float32, -bound, bound)
        b = jax.random.uniform(kb, b_shape, jnp.float32, -bound, bound)
        return w, b

    keys = jax.random.split(key, 2 + n_hidden)
    w_in, b_in = linear(keys[0], in_dim, (hidden_dim, in_dim), (hidden_dim, 1))
    w_hs, b_hs = [], []
    for i in range(n_hidden):
        w, b = linear(keys[1 + i], hidden_dim, (hidden_dim, hidden_dim), (hidden_dim, 1))
        w_hs.append(w)
        b_hs.append(b)
    w_h = jnp.stack(w_hs, axis=0)                    # (n_hidden, H, H)  (out, in) layout
    b_h = jnp.stack(b_hs, axis=0)                    # (n_hidden, H, 1)
    w_out, b_out = linear(keys[-1], hidden_dim, (out_dim, hidden_dim), (out_dim, 1))
    if zero_init:
        w_out = jnp.zeros_like(w_out)                # matches weight.data.fill_(0.)
    return dict(w_in=w_in, b_in=b_in, w_h=w_h, b_h=b_h, w_out=w_out, b_out=b_out)


def _round_up(x, m):
    return ((x + m - 1) // m) * m


def _full_spec(shape):
    n = len(shape)
    return pl.BlockSpec(tuple(shape), lambda i, _n=n: (0,) * _n)


def _forward_impl(s, t, params, *, tb=4096, compute_dtype=jnp.float32, gelu_approx=True):
    """Forward pass. s: (B, s_emb_dim), t: (B, t_dim) -> (B, out_dim)."""
    s = s.astype(jnp.float32)
    t = t.astype(jnp.float32)
    B = s.shape[0]

    # Lane-dense, feature-major input: one (in_dim, B) operand replaces the split s/t tiles
    # (and merges w_s/w_t back into a single K=32 dot inside the kernel).
    x_fm = jnp.concatenate([s, t], axis=-1).T        # (in_dim, B)
    in_dim = x_fm.shape[0]

    w_in, b_in = params["w_in"], params["b_in"]
    w_h, b_h = params["w_h"], params["b_h"]
    w_out, b_out = params["w_out"], params["b_out"]
    n_hidden = w_h.shape[0]
    out_dim = w_out.shape[0]

    is_f32 = (compute_dtype == jnp.float32)
    w_in_c = w_in if is_f32 else w_in.astype(compute_dtype)
    w_h_c = w_h if is_f32 else w_h.astype(compute_dtype)
    w_out_c = w_out if is_f32 else w_out.astype(compute_dtype)

    # Batch tiling (batch lives on the lane axis now):
    #  * tiny batch -> one block equal to the full array (always legal),
    #  * otherwise 128-multiple tiles, capped so grid_b >= 2 (keeps both v7x TCs busy);
    #    ragged last tile handled by Pallas block-boundary padding (rows independent).
    if B <= 128:
        tb_eff = B
    else:
        tb_eff = min(_round_up(tb, 128), _round_up((B + 1) // 2, 128))
        tb_eff = max(tb_eff, 128)
    grid_b = (B + tb_eff - 1) // tb_eff
    b_pad = grid_b * tb_eff

    out = pl.pallas_call(
        functools.partial(_mlp_kernel, n_hidden=n_hidden,
                          compute_dtype=compute_dtype, gelu_approx=gelu_approx),
        out_shape=jax.ShapeDtypeStruct((out_dim, b_pad), jnp.float32),
        grid_spec=pltpu.PrefetchScalarGridSpec(
            num_scalar_prefetch=0,
            grid=(grid_b,),
            in_specs=[
                pl.BlockSpec((in_dim, tb_eff), lambda i: (0, i)),  # x, lane-dense over batch
                _full_spec(w_in_c.shape), _full_spec(b_in.shape),
                _full_spec(w_h_c.shape), _full_spec(b_h.shape),
                _full_spec(w_out_c.shape), _full_spec(b_out.shape),
            ],
            # Lane-dense output: each grid step writes a full (out_dim, tb) block.
            out_specs=pl.BlockSpec((out_dim, tb_eff), lambda i: (0, i)),
        ),
        compiler_params=pltpu.CompilerParams(dimension_semantics=("parallel",)),
    )(x_fm, w_in_c, b_in, w_h_c, b_h, w_out_c, b_out)

    # (out_dim, b_pad) -> (B, out_dim); for out_dim=1 this is a free reshape.
    return out.T[:B]


# Jitted public entry: weight casts, the input transpose and the output slice fuse into one
# dispatch instead of a half-dozen tiny XLA ops per call.
langevin_scaling_forward = jax.jit(
    _forward_impl, static_argnames=("tb", "compute_dtype", "gelu_approx"))


def _reference_forward(s, t, params, compute_dtype=jnp.float32, gelu_approx=True):
    gelu = _gelu_tanh if gelu_approx else _gelu_exact
    cast = lambda a: a.astype(compute_dtype)
    x = jnp.concatenate([s, t], axis=-1).astype(jnp.float32)
    h = gelu(jnp.dot(cast(x), cast(params["w_in"]).T,
                     preferred_element_type=jnp.float32) + params["b_in"].T)
    for i in range(params["w_h"].shape[0]):
        h = gelu(jnp.dot(cast(h), cast(params["w_h"][i]).T,
                         preferred_element_type=jnp.float32) + params["b_h"][i].T)
    return (jnp.dot(cast(h), cast(params["w_out"]).T,
                    preferred_element_type=jnp.float32) + params["b_out"].T)


if __name__ == "__main__":
    s_emb_dim, t_dim, hidden_dim, layers, out_dim = 16, 16, 64, 3, 1

    key = jax.random.PRNGKey(0)
    k_s, k_t, k_p, k_s2, k_t2 = jax.random.split(key, 5)
    params = init_langevin_scaling_params(
        k_p, s_emb_dim, t_dim, hidden_dim=hidden_dim, layers=layers,
        out_dim=out_dim, zero_init=False)

    # Case 1: small batch, single full-array tile, exact-erf GELU, f32 (torch-exact numerics).
    B = 8
    s = jax.random.normal(k_s, (B, s_emb_dim), jnp.float32)
    t = jax.random.normal(k_t, (B, t_dim), jnp.float32)
    y = jax.block_until_ready(langevin_scaling_forward(s, t, params, gelu_approx=False))
    y_ref = _reference_forward(s, t, params, gelu_approx=False)
    assert y.shape == (B, out_dim), y.shape
    assert jnp.allclose(y, y_ref, atol=1e-5, rtol=1e-5), float(jnp.max(jnp.abs(y - y_ref)))

    # Case 2: multi-tile ragged batch (2 x 128 tiles for B=200, exercises the megacore split),
    # default tanh-GELU (EUP path), f32.
    B2 = 200
    s2 = jax.random.normal(k_s2, (B2, s_emb_dim), jnp.float32)
    t2 = jax.random.normal(k_t2, (B2, t_dim), jnp.float32)
    y2 = jax.block_until_ready(langevin_scaling_forward(s2, t2, params))
    y2_ref = _reference_forward(s2, t2, params, gelu_approx=True)
    assert y2.shape == (B2, out_dim), y2.shape
    assert jnp.allclose(y2, y2_ref, atol=1e-5, rtol=1e-5), float(jnp.max(jnp.abs(y2 - y2_ref)))

    # Case 3: bf16 MXU-operand path (f32 accumulation / bias / GELU), only if exactness not needed.
    y3 = jax.block_until_ready(
        langevin_scaling_forward(s2, t2, params, compute_dtype=jnp.bfloat16))
    y3_ref = _reference_forward(s2, t2, params, compute_dtype=jnp.bfloat16, gelu_approx=True)
    assert jnp.allclose(y3, y3_ref, atol=1e-2, rtol=1e-2), float(jnp.max(jnp.abs(y3 - y3_ref)))

    print("KERNEL_OK")
</pallas_src>

<mosaic_0001>
module attributes {stable_mosaic.version = 11 : i64} {
  func.func @_mlp_kernel(%arg0: i32, %arg1: memref<32x8xf32, #tpu.memory_space<vmem>>, %arg2: memref<64x32xf32, #tpu.memory_space<vmem>>, %arg3: memref<64x1xf32, #tpu.memory_space<vmem>>, %arg4: memref<2x64x64xf32, #tpu.memory_space<vmem>>, %arg5: memref<2x64x1xf32, #tpu.memory_space<vmem>>, %arg6: memref<1x64xf32, #tpu.memory_space<vmem>>, %arg7: memref<1x1xf32, #tpu.memory_space<vmem>>, %arg8: memref<1x8xf32, #tpu.memory_space<vmem>>) attributes {dimension_semantics = [#tpu.dimension_semantics<parallel>], iteration_bounds = array<i64: 1>, scalar_prefetch = 0 : i64, scratch_operands = 0 : i64, tpu.core_type = #tpu.core_type<tc>, window_params = [{transform_indices = @transform_0, window_bounds = array<i64: 32, 8>}, {pipeline_mode = #tpu.pipeline_mode<synchronous>, transform_indices = @transform_1, window_bounds = array<i64: 64, 32>}, {pipeline_mode = #tpu.pipeline_mode<synchronous>, transform_indices = @transform_2, window_bounds = array<i64: 64, 1>}, {pipeline_mode = #tpu.pipeline_mode<synchronous>, transform_indices = @transform_3, window_bounds = array<i64: 2, 64, 64>}, {pipeline_mode = #tpu.pipeline_mode<synchronous>, transform_indices = @transform_4, window_bounds = array<i64: 2, 64, 1>}, {pipeline_mode = #tpu.pipeline_mode<synchronous>, transform_indices = @transform_5, window_bounds = array<i64: 1, 64>}, {pipeline_mode = #tpu.pipeline_mode<synchronous>, transform_indices = @transform_6, window_bounds = array<i64: 1, 1>}, {transform_indices = @transform_7, window_bounds = array<i64: 1, 8>}]} {
    %c0 = arith.constant 0 : index
    %c0_0 = arith.constant 0 : index
    %0 = vector.load %arg2[%c0, %c0_0] : memref<64x32xf32, #tpu.memory_space<vmem>>, vector<64x32xf32>
    %c0_1 = arith.constant 0 : index
    %c0_2 = arith.constant 0 : index
    %1 = vector.load %arg1[%c0_1, %c0_2] : memref<32x8xf32, #tpu.memory_space<vmem>>, vector<32x8xf32>
    %cst = arith.constant dense<0.000000e+00> : vector<64x8xf32>
    %2 = tpu.matmul %0, %1, %cst {dimension_numbers = #tpu.dot_dimension_numbers<[1], [0], [0], [1], [0, 0, 1, 1], [], []>} : vector<64x32xf32>, vector<32x8xf32>, vector<64x8xf32> -> vector<64x8xf32>
    %c0_3 = arith.constant 0 : index
    %c0_4 = arith.constant 0 : index
    %3 = vector.load %arg3[%c0_3, %c0_4] : memref<64x1xf32, #tpu.memory_space<vmem>>, vector<64x1xf32>
    %4 = vector.broadcast %3 : vector<64x1xf32> to vector<64x8xf32>
    %5 = arith.addf %2, %4 : vector<64x8xf32>
    %cst_5 = arith.constant 5.000000e-01 : f32
    %6 = vector.broadcast %cst_5 : f32 to vector<64x8xf32>
    %7 = arith.mulf %6, %5 : vector<64x8xf32>
    %cst_6 = arith.constant 0.707106769 : f32
    %8 = vector.broadcast %cst_6 : f32 to vector<64x8xf32>
    %9 = arith.mulf %5, %8 : vector<64x8xf32>
    %10 = math.erf %9 : vector<64x8xf32>
    %cst_7 = arith.constant 1.000000e+00 : f32
    %11 = vector.broadcast %cst_7 : f32 to vector<64x8xf32>
    %12 = arith.addf %11, %10 : vector<64x8xf32>
    %13 = arith.mulf %7, %12 : vector<64x8xf32>
    %c0_8 = arith.constant 0 : index
    %c0_9 = arith.constant 0 : index
    %c0_10 = arith.constant 0 : index
    %14 = vector.load %arg4[%c0_8, %c0_9, %c0_10] : memref<2x64x64xf32, #tpu.memory_space<vmem>>, vector<1x64x64xf32>
    %15 = vector.shape_cast %14 : vector<1x64x64xf32> to vector<64x64xf32>
    %cst_11 = arith.constant dense<0.000000e+00> : vector<64x8xf32>
    %16 = tpu.matmul %15, %13, %cst_11 {dimension_numbers = #tpu.dot_dimension_numbers<[1], [0], [0], [1], [0, 0, 1, 1], [], []>} : vector<64x64xf32>, vector<64x8xf32>, vector<64x8xf32> -> vector<64x8xf32>
    %c0_12 = arith.constant 0 : index
    %c0_13 = arith.constant 0 : index
    %c0_14 = arith.constant 0 : index
    %17 = vector.load %arg5[%c0_12, %c0_13, %c0_14] : memref<2x64x1xf32, #tpu.memory_space<vmem>>, vector<1x64x1xf32>
    %18 = vector.shape_cast %17 : vector<1x64x1xf32> to vector<64x1xf32>
    %19 = vector.broadcast %18 : vector<64x1xf32> to vector<64x8xf32>
    %20 = arith.addf %16, %19 : vector<64x8xf32>
    %cst_15 = arith.constant 5.000000e-01 : f32
    %21 = vector.broadcast %cst_15 : f32 to vector<64x8xf32>
    %22 = arith.mulf %21, %20 : vector<64x8xf32>
    %cst_16 = arith.constant 0.707106769 : f32
    %23 = vector.broadcast %cst_16 : f32 to vector<64x8xf32>
    %24 = arith.mulf %20, %23 : vector<64x8xf32>
    %25 = math.erf %24 : vector<64x8xf32>
    %cst_17 = arith.constant 1.000000e+00 : f32
    %26 = vector.broadcast %cst_17 : f32 to vector<64x8xf32>
    %27 = arith.addf %26, %25 : vector<64x8xf32>
    %28 = arith.mulf %22, %27 : vector<64x8xf32>
    %c1 = arith.constant 1 : index
    %c0_18 = arith.constant 0 : index
    %c0_19 = arith.constant 0 : index
    %29 = vector.load %arg4[%c1, %c0_18, %c0_19] : memref<2x64x64xf32, #tpu.memory_space<vmem>>, vector<1x64x64xf32>
    %30 = vector.shape_cast %29 : vector<1x64x64xf32> to vector<64x64xf32>
    %cst_20 = arith.constant dense<0.000000e+00> : vector<64x8xf32>
    %31 = tpu.matmul %30, %28, %cst_20 {dimension_numbers = #tpu.dot_dimension_numbers<[1], [0], [0], [1], [0, 0, 1, 1], [], []>} : vector<64x64xf32>, vector<64x8xf32>, vector<64x8xf32> -> vector<64x8xf32>
    %c1_21 = arith.constant 1 : index
    %c0_22 = arith.constant 0 : index
    %c0_23 = arith.constant 0 : index
    %32 = vector.load %arg5[%c1_21, %c0_22, %c0_23] : memref<2x64x1xf32, #tpu.memory_space<vmem>>, vector<1x64x1xf32>
    %33 = vector.shape_cast %32 : vector<1x64x1xf32> to vector<64x1xf32>
    %34 = vector.broadcast %33 : vector<64x1xf32> to vector<64x8xf32>
    %35 = arith.addf %31, %34 : vector<64x8xf32>
    %cst_24 = arith.constant 5.000000e-01 : f32
    %36 = vector.broadcast %cst_24 : f32 to vector<64x8xf32>
    %37 = arith.mulf %36, %35 : vector<64x8xf32>
    %cst_25 = arith.constant 0.707106769 : f32
    %38 = vector.broadcast %cst_25 : f32 to vector<64x8xf32>
    %39 = arith.mulf %35, %38 : vector<64x8xf32>
    %40 = math.erf %39 : vector<64x8xf32>
    %cst_26 = arith.constant 1.000000e+00 : f32
    %41 = vector.broadcast %cst_26 : f32 to vector<64x8xf32>
    %42 = arith.addf %41, %40 : vector<64x8xf32>
    %43 = arith.mulf %37, %42 : vector<64x8xf32>
    %c0_27 = arith.constant 0 : index
    %c0_28 = arith.constant 0 : index
    %44 = vector.load %arg6[%c0_27, %c0_28] : memref<1x64xf32, #tpu.memory_space<vmem>>, vector<1x64xf32>
    %cst_29 = arith.constant dense<0.000000e+00> : vector<1x8xf32>
    %45 = tpu.matmul %44, %43, %cst_29 {dimension_numbers = #tpu.dot_dimension_numbers<[1], [0], [0], [1], [0, 0, 1, 1], [], []>} : vector<1x64xf32>, vector<64x8xf32>, vector<1x8xf32> -> vector<1x8xf32>
    %c0_30 = arith.constant 0 : index
    %c0_31 = arith.constant 0 : index
    %46 = vector.load %arg7[%c0_30, %c0_31] : memref<1x1xf32, #tpu.memory_space<vmem>>, vector<1x1xf32>
    %47 = vector.broadcast %46 : vector<1x1xf32> to vector<1x8xf32>
    %48 = arith.addf %45, %47 : vector<1x8xf32>
    %c0_32 = arith.constant 0 : index
    %c0_33 = arith.constant 0 : index
    %49 = vector.load %arg8[%c0_32, %c0_33] : memref<1x8xf32, #tpu.memory_space<vmem>>, vector<1x8xf32>
    tpu.vector_store %arg8[%c0_32, %c0_33], %48 {strides = array<i32>} : memref<1x8xf32, #tpu.memory_space<vmem>>, vector<1x8xf32>,
    return
  }
  func.func @transform_0(%arg0: i32) -> (i32, i32) {
    %c0_i32 = arith.constant 0 : i32
    %c0_i32_0 = arith.constant 0 : i32
    return %c0_i32, %arg0 : i32, i32
  }
  func.func @transform_1(%arg0: i32) -> (i32, i32) {
    %c0_i32 = arith.constant 0 : i32
    %c0_i32_0 = arith.constant 0 : i32
    %c0_i32_1 = arith.constant 0 : i32
    return %c0_i32, %c0_i32_0 : i32, i32
  }
  func.func @transform_2(%arg0: i32) -> (i32, i32) {
    %c0_i32 = arith.constant 0 : i32
    %c0_i32_0 = arith.constant 0 : i32
    %c0_i32_1 = arith.constant 0 : i32
    return %c0_i32, %c0_i32_0 : i32, i32
  }
  func.func @transform_3(%arg0: i32) -> (i32, i32, i32) {
    %c0_i32 = arith.constant 0 : i32
    %c0_i32_0 = arith.constant 0 : i32
    %c0_i32_1 = arith.constant 0 : i32
    %c0_i32_2 = arith.constant 0 : i32
    return %c0_i32, %c0_i32_0, %c0_i32_1 : i32, i32, i32
  }
  func.func @transform_4(%arg0: i32) -> (i32, i32, i32) {
    %c0_i32 = arith.constant 0 : i32
    %c0_i32_0 = arith.constant 0 : i32
    %c0_i32_1 = arith.constant 0 : i32
    %c0_i32_2 = arith.constant 0 : i32
    return %c0_i32, %c0_i32_0, %c0_i32_1 : i32, i32, i32
  }
  func.func @transform_5(%arg0: i32) -> (i32, i32) {
    %c0_i32 = arith.constant 0 : i32
    %c0_i32_0 = arith.constant 0 : i32
    %c0_i32_1 = arith.constant 0 : i32
    return %c0_i32, %c0_i32_0 : i32, i32
  }
  func.func @transform_6(%arg0: i32) -> (i32, i32) {
    %c0_i32 = arith.constant 0 : i32
    %c0_i32_0 = arith.constant 0 : i32
    %c0_i32_1 = arith.constant 0 : i32
    return %c0_i32, %c0_i32_0 : i32, i32
  }
  func.func @transform_7(%arg0: i32) -> (i32, i32) {
    %c0_i32 = arith.constant 0 : i32
    %c0_i32_0 = arith.constant 0 : i32
    return %c0_i32, %arg0 : i32, i32
  }
}

</mosaic_0001>

<llo_original>
// kernel: _forward_impl.1
$region0: #{_forward_impl.1}
  #allocation0 [shape = 'u32[]', space=smem, size = 0x4, offset = 0x4, fixed_abs, tag = 'smem constant byte address 0x4 - core index']
  #allocation1 [shape = 'u32[72,128]{1,0:T(1,128)}', space=vmem, size = 0x9000, scoped, tag = 'internal scratch']
  #allocation2 [shape = 'f32[1,1]{1,0:T(1,128)S(1)}', space=vmem, size = 0x200, scoped, tag = 'scoped memory for _forward_impl.1']
  %s0 = inlined_call_operand.vmem [shape: f32[32,8], index: 0, kind: input, shape index: {}]
  %s1 = inlined_call_operand.vmem [shape: f32[64,32], index: 1, kind: input, shape index: {}]
  %s2 = inlined_call_operand.vmem [shape: f32[64,1], index: 2, kind: input, shape index: {}]
  %s3 = inlined_call_operand.vmem [shape: f32[2,64,64], index: 3, kind: input, shape index: {}]
  %s4 = inlined_call_operand.vmem [shape: f32[2,64,1], index: 4, kind: input, shape index: {}]
  %s5 = inlined_call_operand.vmem [shape: f32[1,64], index: 5, kind: input, shape index: {}]
  %s6 = inlined_call_operand.<no memory space> [shape: f32[1,1], index: 6, kind: input, shape index: {}]
  %s7 = inlined_call_operand.hbm [shape: f32[1,8], index: 7, kind: output, shape index: {}]
  %s8 = sld [smem:[#allocation0]]
  $region38: #{_forward_impl.1} parent=0
    _
  %s10 = ssub.s32 1, %s8
  %s11 = scalar_select 0, %s10, %s8
  %v12 = vstv %s6
  %13 = vst [vmem:[#allocation2] sm:$0x1] %v12
  $region1: #{_forward_impl.1} parent=0
    #allocation3 [shape = 'u8[512]{0}', space=vmem, size = 0x400, scoped, tag = 'output window, operand 0, single buffered']
    #allocation4 [shape = 's32[1]{0}', space=sflag, size = 0x4, scoped, tag = 'scoped memory for _forward_impl.1']
    %14 = vsyncpa [#allocation4], 0
    // Predicated region
    $region2: #{_forward_impl.1} parent=1 // pred_check
      _
    $region3: #{_forward_impl.1} parent=1 // pred_check_branch
      %16 = sbr.rel (0) target = $region5
    $region4: #{_forward_impl.1} parent=1 // pred_region
      _
    $region5: #{_forward_impl.1} parent=1 // pred_fallthru
      _
    // Predicated region
    $region6: #{_forward_impl.1} parent=1 // pred_check
      _
    $region7: #{_forward_impl.1} parent=1 // pred_check_branch
      %18 = sbr.rel (0) target = $region9
    $region8: #{_forward_impl.1} parent=1 // pred_region
      _
    $region9: #{_forward_impl.1} parent=1 // pred_fallthru
      _
    // Predicated region
    $region10: #{_forward_impl.1} parent=1 // pred_check
      _
    $region11: #{_forward_impl.1} parent=1 // pred_check_branch
      %20 = sbr.rel (0) target = $region13
    $region12: #{_forward_impl.1} parent=1 // pred_region
      _
    $region13: #{_forward_impl.1} parent=1 // pred_fallthru
      _
    // Predicated region
    $region14: #{_forward_impl.1} parent=1 // pred_check
      _
    $region15: #{_forward_impl.1} parent=1 // pred_check_branch
      %22 = sbr.rel (0) target = $region17
    $region16: #{_forward_impl.1} parent=1 // pred_region
      _
    $region17: #{_forward_impl.1} parent=1 // pred_fallthru
      _
    // Predicated region
    $region18: #{_forward_impl.1} parent=1 // pred_check
      _
    $region19: #{_forward_impl.1} parent=1 // pred_check_branch
      %24 = sbr.rel (0) target = $region21
    $region20: #{_forward_impl.1} parent=1 // pred_region
      _
    $region21: #{_forward_impl.1} parent=1 // pred_fallthru
      _
    // Predicated region
    $region22: #{_forward_impl.1} parent=1 // pred_check
      _
    $region23: #{_forward_impl.1} parent=1 // pred_check_branch
      %26 = sbr.rel (0) target = $region25
    $region24: #{_forward_impl.1} parent=1 // pred_region
      _
    $region25: #{_forward_impl.1} parent=1 // pred_fallthru
      _
    // Predicated region
    $region26: #{_forward_impl.1} parent=1 // pred_check
      _
    $region27: #{_forward_impl.1} parent=1 // pred_check_branch
      %28 = sbr.rel (0) target = $region29
    $region28: #{_forward_impl.1} parent=1 // pred_region
      _
    $region29: #{_forward_impl.1} parent=1 // pred_fallthru
      _
    %v29 = vld [vmem:[%s1] sm:$0xff]
    %v30 = vld [vmem:[%s1 + $0x8] sm:$0xff]
    %v31 = vld [vmem:[%s1 + $0x10] sm:$0xff]
    %v32 = vld [vmem:[%s1 + $0x18] sm:$0xff]
    %v33 = vld [vmem:[%s1 + $0x20] sm:$0xff]
    %v34 = vld [vmem:[%s1 + $0x28] sm:$0xff]
    %v35 = vld [vmem:[%s1 + $0x30] sm:$0xff]
    %v36 = vld [vmem:[%s1 + $0x38] sm:$0xff]
    %v37 = vld [vmem:[%s0] sm:$0xff]
    %v38 = vld [vmem:[%s0 + $0x8] sm:$0xff]
    %v39 = vld [vmem:[%s0 + $0x10] sm:$0xff]
    %v40 = vld [vmem:[%s0 + $0x18] sm:$0xff]
    %v41 = vld [vmem:[%s2] sm:$0xff]
    %v42 = vld [vmem:[%s2 + $0x8] sm:$0xff]
    %v43 = vld [vmem:[%s2 + $0x10] sm:$0xff]
    %v44 = vld [vmem:[%s2 + $0x18] sm:$0xff]
    %v45 = vld [vmem:[%s2 + $0x20] sm:$0xff]
    %v46 = vld [vmem:[%s2 + $0x28] sm:$0xff]
    %v47 = vld [vmem:[%s2 + $0x30] sm:$0xff]
    %v48 = vld [vmem:[%s2 + $0x38] sm:$0xff]
    %50 = vset.pattern.permute.xlu0 0
    %51 = vperm.xlu0 %50, %v41
    %v52 = vpop.permute.xlu0 %51
    %55 = vset.pattern.permute.xlu0 0
    %56 = vperm.xlu0 %55, %v42
    %v57 = vpop.permute.xlu0 %56
    %60 = vset.pattern.permute.xlu0 0
    %61 = vperm.xlu0 %60, %v43
    %v62 = vpop.permute.xlu0 %61
    %65 = vset.pattern.permute.xlu0 0
    %66 = vperm.xlu0 %65, %v44
    %v67 = vpop.permute.xlu0 %66
    %70 = vset.pattern.permute.xlu0 0
    %71 = vperm.xlu0 %70, %v45
    %v72 = vpop.permute.xlu0 %71
    %75 = vset.pattern.permute.xlu0 0
    %76 = vperm.xlu0 %75, %v46
    %v77 = vpop.permute.xlu0 %76
    %80 = vset.pattern.permute.xlu0 0
    %81 = vperm.xlu0 %80, %v47
    %v82 = vpop.permute.xlu0 %81
    %85 = vset.pattern.permute.xlu0 0
    %86 = vperm.xlu0 %85, %v48
    %v87 = vpop.permute.xlu0 %86
    %vm89 = vcmask 261120
    %v91 = vsel %vm89, %v29, 0
    %v94 = vsel %vm89, %v30, 0
    %v97 = vsel %vm89, %v31, 0
    %v100 = vsel %vm89, %v32, 0
    %v103 = vsel %vm89, %v33, 0
    %v106 = vsel %vm89, %v34, 0
    %v109 = vsel %vm89, %v35, 0
    %v112 = vsel %vm89, %v36, 0
    %114 = vmatpush.msra.mxu0 0.0
    %115 = vmatpush.msra.mxu0 0.0
    %116 = vmatpush.msra.mxu0 0.0
    %117 = vmatpush.msra.mxu0 0.0
    %118 = vmatpush.msra.mxu0 0.0
    %119 = vmatpush.msra.mxu0 0.0
    %120 = vmatpush.msra.mxu0 0.0
    %121 = vmatpush.msra.mxu0 0.0
    %122 = vmatpush.msra.mxu0 0.0
    %123 = vmatpush.msra.mxu0 0.0
    %124 = vmatpush.msra.mxu0 0.0
    %125 = vmatpush.msra.mxu0 0.0
    %126 = vmatpush.msra.mxu0 %v40
    %127 = vmatpush.msra.mxu0 %v39
    %128 = vmatpush.msra.mxu0 %v38
    %129 = vmatpush.msra.mxu0 %v37
    %130 = vmatmul.f32.gmra.mxu0 %v91
    %v131 = vpop.f32.mrf.mxu0
    %v132 = vadd.f32 %v52, %v131
    %133 = vmatmul.f32.gmra.mxu0 %v94
    %v134 = vpop.f32.mrf.mxu0
    %v135 = vadd.f32 %v57, %v134
    %136 = vmatmul.f32.gmra.mxu0 %v97
    %v137 = vpop.f32.mrf.mxu0
    %v138 = vadd.f32 %v62, %v137
    %139 = vmatmul.f32.gmra.mxu0 %v100
    %v140 = vpop.f32.mrf.mxu0
    %v141 = vadd.f32 %v67, %v140
    %142 = vmatmul.f32.gmra.mxu0 %v103
    %v143 = vpop.f32.mrf.mxu0
    %v144 = vadd.f32 %v72, %v143
    %145 = vmatmul.f32.gmra.mxu0 %v106
    %v146 = vpop.f32.mrf.mxu0
    %v147 = vadd.f32 %v77, %v146
    %148 = vmatmul.f32.gmra.mxu0 %v109
    %v149 = vpop.f32.mrf.mxu0
    %v150 = vadd.f32 %v82, %v149
    %151 = vmatmul.f32.gmra.mxu0 %v112
    %v152 = vpop.f32.mrf.mxu0
    %v153 = vadd.f32 %v87, %v152
    %154 = vdwg.mxu0
    %v155 = vmul.f32 %v132, 0.5
    %v156 = vmul.f32 %v135, 0.5
    %v157 = vmul.f32 %v138, 0.5
    %v158 = vmul.f32 %v141, 0.5
    %v159 = vmul.f32 %v144, 0.5
    %v160 = vmul.f32 %v147, 0.5
    %v161 = vmul.f32 %v150, 0.5
    %v162 = vmul.f32 %v153, 0.5
    %v163 = vmul.f32 %v132, 0.70710677
    %v164 = vmul.f32 %v135, 0.70710677
    %v165 = vmul.f32 %v138, 0.70710677
    %v166 = vmul.f32 %v141, 0.70710677
    %v167 = vmul.f32 %v144, 0.70710677
    %v168 = vmul.f32 %v147, 0.70710677
    %v169 = vmul.f32 %v150, 0.70710677
    %v170 = vmul.f32 %v153, 0.70710677
    %v171 = vmul.f32 %v163, %v163
    %v172 = vmin.f32 16.0, %v171
    %v173 = vmul.f32 %v172, 2.1237322e-06
    %v174 = vadd.f32 %v173, 0.00028619796
    %v175 = vmul.f32 %v172, %v174
    %v176 = vadd.f32 %v175, 0.0036580483
    %v177 = vmul.f32 %v172, %v176
    %v178 = vadd.f32 %v177, 0.05243302
    %v179 = vmul.f32 %v172, %v178
    %v180 = vadd.f32 %v179, 0.18741608
    %v181 = vmul.f32 %v172, %v180
    %v182 = vadd.f32 %v181, 1.1283791
    %v183 = vmul.f32 %v163, %v182
    %v184 = vmul.f32 %v172, 3.8918573e-05
    %v185 = vadd.f32 %v184, 0.001143296
    %v186 = vmul.f32 %v172, %v185
    %v187 = vadd.f32 %v186, 0.014752088
    %v188 = vmul.f32 %v172, %v187
    %v189 = vadd.f32 %v188, 0.112945676
    %v190 = vmul.f32 %v172, %v189
    %v191 = vadd.f32 %v190, 0.4994258
    %v192 = vmul.f32 %v172, %v191
    %v193 = vadd.f32 %v192, 1.0
    %v194 = vrcp.pop %v193
    %v195 = vmul.f32 %v193, %v194
    %v196 = vsub.f32 1.0, %v195
    %v197 = vmul.f32 %v194, %v196
    %v198 = vadd.f32 %v194, %v197
    %vm199 = vweird.f32 %v193
    %vm200 = vweird.f32 %v194
    %vm201 = vmor %vm199, %vm200
    %v202 = vsel %vm201, %v194, %v198
    %v203 = vand.u32 2147483647, %v193
    %vm204 = vcmp.eq.f32.partialorder %v203, 8.507059e+37
    %v205 = vand.u32 %v193, 2147483648
    %v206 = vor.u32 1.1754944e-38, %v205
    %v207 = vsel %vm204, %v206, %v202
    %v208 = vmul.f32 %v183, %v207
    %v209 = vmin.f32 %v208, 1.0
    %v210 = vmax.f32 %v209, -1.0
    %v211 = vmul.f32 %v164, %v164
    %v212 = vmin.f32 16.0, %v211
    %v213 = vmul.f32 %v212, 2.1237322e-06
    %v214 = vadd.f32 %v213, 0.00028619796
    %v215 = vmul.f32 %v212, %v214
    %v216 = vadd.f32 %v215, 0.0036580483
    %v217 = vmul.f32 %v212, %v216
    %v218 = vadd.f32 %v217, 0.05243302
    %v219 = vmul.f32 %v212, %v218
    %v220 = vadd.f32 %v219, 0.18741608
    %v221 = vmul.f32 %v212, %v220
    %v222 = vadd.f32 %v221, 1.1283791
    %v223 = vmul.f32 %v164, %v222
    %v224 = vmul.f32 %v212, 3.8918573e-05
    %v225 = vadd.f32 %v224, 0.001143296
    %v226 = vmul.f32 %v212, %v225
    %v227 = vadd.f32 %v226, 0.014752088
    %v228 = vmul.f32 %v212, %v227
    %v229 = vadd.f32 %v228, 0.112945676
    %v230 = vmul.f32 %v212, %v229
    %v231 = vadd.f32 %v230, 0.4994258
    %v232 = vmul.f32 %v212, %v231
    %v233 = vadd.f32 %v232, 1.0
    %v234 = vrcp.pop %v233
    %v235 = vmul.f32 %v233, %v234
    %v236 = vsub.f32 1.0, %v235
    %v237 = vmul.f32 %v234, %v236
    %v238 = vadd.f32 %v234, %v237
    %vm239 = vweird.f32 %v233
    %vm240 = vweird.f32 %v234
    %vm241 = vmor %vm239, %vm240
    %v242 = vsel %vm241, %v234, %v238
    %v243 = vand.u32 2147483647, %v233
    %vm244 = vcmp.eq.f32.partialorder %v243, 8.507059e+37
    %v245 = vand.u32 %v233, 2147483648
    %v246 = vor.u32 1.1754944e-38, %v245
    %v247 = vsel %vm244, %v246, %v242
    %v248 = vmul.f32 %v223, %v247
    %v249 = vmin.f32 %v248, 1.0
    %v250 = vmax.f32 %v249, -1.0
    %v251 = vmul.f32 %v165, %v165
    %v252 = vmin.f32 16.0, %v251
    %v253 = vmul.f32 %v252, 2.1237322e-06
    %v254 = vadd.f32 %v253, 0.00028619796
    %v255 = vmul.f32 %v252, %v254
    %v256 = vadd.f32 %v255, 0.0036580483
    %v257 = vmul.f32 %v252, %v256
    %v258 = vadd.f32 %v257, 0.05243302
    %v259 = vmul.f32 %v252, %v258
    %v260 = vadd.f32 %v259, 0.18741608
    %v261 = vmul.f32 %v252, %v260
    %v262 = vadd.f32 %v261, 1.1283791
    %v263 = vmul.f32 %v165, %v262
    %v264 = vmul.f32 %v252, 3.8918573e-05
    %v265 = vadd.f32 %v264, 0.001143296
    %v266 = vmul.f32 %v252, %v265
    %v267 = vadd.f32 %v266, 0.014752088
    %v268 = vmul.f32 %v252, %v267
    %v269 = vadd.f32 %v268, 0.112945676
    %v270 = vmul.f32 %v252, %v269
    %v271 = vadd.f32 %v270, 0.4994258
    %v272 = vmul.f32 %v252, %v271
    %v273 = vadd.f32 %v272, 1.0
    %v274 = vrcp.pop %v273
    %v275 = vmul.f32 %v273, %v274
    %v276 = vsub.f32 1.0, %v275
    %v277 = vmul.f32 %v274, %v276
    %v278 = vadd.f32 %v274, %v277
    %vm279 = vweird.f32 %v273
    %vm280 = vweird.f32 %v274
    %vm281 = vmor %vm279, %vm280
    %v282 = vsel %vm281, %v274, %v278
    %v283 = vand.u32 2147483647, %v273
    %vm284 = vcmp.eq.f32.partialorder %v283, 8.507059e+37
    %v285 = vand.u32 %v273, 2147483648
    %v286 = vor.u32 1.1754944e-38, %v285
    %v287 = vsel %vm284, %v286, %v282
    %v288 = vmul.f32 %v263, %v287
    %v289 = vmin.f32 %v288, 1.0
    %v290 = vmax.f32 %v289, -1.0
    %v291 = vmul.f32 %v166, %v166
    %v292 = vmin.f32 16.0, %v291
    %v293 = vmul.f32 %v292, 2.1237322e-06
    %v294 = vadd.f32 %v293, 0.00028619796
    %v295 = vmul.f32 %v292, %v294
    %v296 = vadd.f32 %v295, 0.0036580483
    %v297 = vmul.f32 %v292, %v296
    %v298 = vadd.f32 %v297, 0.05243302
    %v299 = vmul.f32 %v292, %v298
    %v300 = vadd.f32 %v299, 0.18741608
    %v301 = vmul.f32 %v292, %v300
    %v302 = vadd.f32 %v301, 1.1283791
    %v303 = vmul.f32 %v166, %v302
    %v304 = vmul.f32 %v292, 3.8918573e-05
    %v305 = vadd.f32 %v304, 0.001143296
    %v306 = vmul.f32 %v292, %v305
    %v307 = vadd.f32 %v306, 0.014752088
    %v308 = vmul.f32 %v292, %v307
    %v309 = vadd.f32 %v308, 0.112945676
    %v310 = vmul.f32 %v292, %v309
    %v311 = vadd.f32 %v310, 0.4994258
    %v312 = vmul.f32 %v292, %v311
    %v313 = vadd.f32 %v312, 1.0
    %v314 = vrcp.pop %v313
    %v315 = vmul.f32 %v313, %v314
    %v316 = vsub.f32 1.0, %v315
    %v317 = vmul.f32 %v314, %v316
    %v318 = vadd.f32 %v314, %v317
    %vm319 = vweird.f32 %v313
    %vm320 = vweird.f32 %v314
    %vm321 = vmor %vm319, %vm320
    %v322 = vsel %vm321, %v314, %v318
    %v323 = vand.u32 2147483647, %v313
    %vm324 = vcmp.eq.f32.partialorder %v323, 8.507059e+37
    %v325 = vand.u32 %v313, 2147483648
    %v326 = vor.u32 1.1754944e-38, %v325
    %v327 = vsel %vm324, %v326, %v322
    %v328 = vmul.f32 %v303, %v327
    %v329 = vmin.f32 %v328, 1.0
    %v330 = vmax.f32 %v329, -1.0
    %v331 = vmul.f32 %v167, %v167
    %v332 = vmin.f32 16.0, %v331
    %v333 = vmul.f32 %v332, 2.1237322e-06
    %v334 = vadd.f32 %v333, 0.00028619796
    %v335 = vmul.f32 %v332, %v334
    %v336 = vadd.f32 %v335, 0.0036580483
    %v337 = vmul.f32 %v332, %v336
    %v338 = vadd.f32 %v337, 0.05243302
    %v339 = vmul.f32 %v332, %v338
    %v340 = vadd.f32 %v339, 0.18741608
    %v341 = vmul.f32 %v332, %v340
    %v342 = vadd.f32 %v341, 1.1283791
    %v343 = vmul.f32 %v167, %v342
    %v344 = vmul.f32 %v332, 3.8918573e-05
    %v345 = vadd.f32 %v344, 0.001143296
    %v346 = vmul.f32 %v332, %v345
    %v347 = vadd.f32 %v346, 0.014752088
    %v348 = vmul.f32 %v332, %v347
    %v349 = vadd.f32 %v348, 0.112945676
    %v350 = vmul.f32 %v332, %v349
    %v351 = vadd.f32 %v350, 0.4994258
    %v352 = vmul.f32 %v332, %v351
    %v353 = vadd.f32 %v352, 1.0
    %v354 = vrcp.pop %v353
    %v355 = vmul.f32 %v353, %v354
    %v356 = vsub.f32 1.0, %v355
    %v357 = vmul.f32 %v354, %v356
    %v358 = vadd.f32 %v354, %v357
    %vm359 = vweird.f32 %v353
    %vm360 = vweird.f32 %v354
    %vm361 = vmor %vm359, %vm360
    %v362 = vsel %vm361, %v354, %v358
    %v363 = vand.u32 2147483647, %v353
    %vm364 = vcmp.eq.f32.partialorder %v363, 8.507059e+37
    %v365 = vand.u32 %v353, 2147483648
    %v366 = vor.u32 1.1754944e-38, %v365
    %v367 = vsel %vm364, %v366, %v362
    %v368 = vmul.f32 %v343, %v367
    %v369 = vmin.f32 %v368, 1.0
    %v370 = vmax.f32 %v369, -1.0
    %v371 = vmul.f32 %v168, %v168
    %v372 = vmin.f32 16.0, %v371
    %v373 = vmul.f32 %v372, 2.1237322e-06
    %v374 = vadd.f32 %v373, 0.00028619796
    %v375 = vmul.f32 %v372, %v374
    %v376 = vadd.f32 %v375, 0.0036580483
    %v377 = vmul.f32 %v372, %v376
    %v378 = vadd.f32 %v377, 0.05243302
    %v379 = vmul.f32 %v372, %v378
    %v380 = vadd.f32 %v379, 0.18741608
    %v381 = vmul.f32 %v372, %v380
    %v382 = vadd.f32 %v381, 1.1283791
    %v383 = vmul.f32 %v168, %v382
    %v384 = vmul.f32 %v372, 3.8918573e-05
    %v385 = vadd.f32 %v384, 0.001143296
    %v386 = vmul.f32 %v372, %v385
    %v387 = vadd.f32 %v386, 0.014752088
    %v388 = vmul.f32 %v372, %v387
    %v389 = vadd.f32 %v388, 0.112945676
    %v390 = vmul.f32 %v372, %v389
    %v391 = vadd.f32 %v390, 0.4994258
    %v392 = vmul.f32 %v372, %v391
    %v393 = vadd.f32 %v392, 1.0
    %v394 = vrcp.pop %v393
    %v395 = vmul.f32 %v393, %v394
    %v396 = vsub.f32 1.0, %v395
    %v397 = vmul.f32 %v394, %v396
    %v398 = vadd.f32 %v394, %v397
    %vm399 = vweird.f32 %v393
    %vm400 = vweird.f32 %v394
    %vm401 = vmor %vm399, %vm400
    %v402 = vsel %vm401, %v394, %v398
    %v403 = vand.u32 2147483647, %v393
    %vm404 = vcmp.eq.f32.partialorder %v403, 8.507059e+37
    %v405 = vand.u32 %v393, 2147483648
    %v406 = vor.u32 1.1754944e-38, %v405
    %v407 = vsel %vm404, %v406, %v402
    %v408 = vmul.f32 %v383, %v407
    %v409 = vmin.f32 %v408, 1.0
    %v410 = vmax.f32 %v409, -1.0
    %v411 = vmul.f32 %v169, %v169
    %v412 = vmin.f32 16.0, %v411
    %v413 = vmul.f32 %v412, 2.1237322e-06
    %v414 = vadd.f32 %v413, 0.00028619796
    %v415 = vmul.f32 %v412, %v414
    %v416 = vadd.f32 %v415, 0.0036580483
    %v417 = vmul.f32 %v412, %v416
    %v418 = vadd.f32 %v417, 0.05243302
    %v419 = vmul.f32 %v412, %v418
    %v420 = vadd.f32 %v419, 0.18741608
    %v421 = vmul.f32 %v412, %v420
    %v422 = vadd.f32 %v421, 1.1283791
    %v423 = vmul.f32 %v169, %v422
    %v424 = vmul.f32 %v412, 3.8918573e-05
    %v425 = vadd.f32 %v424, 0.001143296
    %v426 = vmul.f32 %v412, %v425
    %v427 = vadd.f32 %v426, 0.014752088
    %v428 = vmul.f32 %v412, %v427
    %v429 = vadd.f32 %v428, 0.112945676
    %v430 = vmul.f32 %v412, %v429
    %v431 = vadd.f32 %v430, 0.4994258
    %v432 = vmul.f32 %v412, %v431
    %v433 = vadd.f32 %v432, 1.0
    %v434 = vrcp.pop %v433
    %v435 = vmul.f32 %v433, %v434
    %v436 = vsub.f32 1.0, %v435
    %v437 = vmul.f32 %v434, %v436
    %v438 = vadd.f32 %v434, %v437
    %vm439 = vweird.f32 %v433
    %vm440 = vweird.f32 %v434
    %vm441 = vmor %vm439, %vm440
    %v442 = vsel %vm441, %v434, %v438
    %v443 = vand.u32 2147483647, %v433
    %vm444 = vcmp.eq.f32.partialorder %v443, 8.507059e+37
    %v445 = vand.u32 %v433, 2147483648
    %v446 = vor.u32 1.1754944e-38, %v445
    %v447 = vsel %vm444, %v446, %v442
    %v448 = vmul.f32 %v423, %v447
    %v449 = vmin.f32 %v448, 1.0
    %v450 = vmax.f32 %v449, -1.0
    %v451 = vmul.f32 %v170, %v170
    %v452 = vmin.f32 16.0, %v451
    %v453 = vmul.f32 %v452, 2.1237322e-06
    %v454 = vadd.f32 %v453, 0.00028619796
    %v455 = vmul.f32 %v452, %v454
    %v456 = vadd.f32 %v455, 0.0036580483
    %v457 = vmul.f32 %v452, %v456
    %v458 = vadd.f32 %v457, 0.05243302
    %v459 = vmul.f32 %v452, %v458
    %v460 = vadd.f32 %v459, 0.18741608
    %v461 = vmul.f32 %v452, %v460
    %v462 = vadd.f32 %v461, 1.1283791
    %v463 = vmul.f32 %v170, %v462
    %v464 = vmul.f32 %v452, 3.8918573e-05
    %v465 = vadd.f32 %v464, 0.001143296
    %v466 = vmul.f32 %v452, %v465
    %v467 = vadd.f32 %v466, 0.014752088
    %v468 = vmul.f32 %v452, %v467
    %v469 = vadd.f32 %v468, 0.112945676
    %v470 = vmul.f32 %v452, %v469
    %v471 = vadd.f32 %v470, 0.4994258
    %v472 = vmul.f32 %v452, %v471
    %v473 = vadd.f32 %v472, 1.0
    %v474 = vrcp.pop %v473
    %v475 = vmul.f32 %v473, %v474
    %v476 = vsub.f32 1.0, %v475
    %v477 = vmul.f32 %v474, %v476
    %v478 = vadd.f32 %v474, %v477
    %vm479 = vweird.f32 %v473
    %vm480 = vweird.f32 %v474
    %vm481 = vmor %vm479, %vm480
    %v482 = vsel %vm481, %v474, %v478
    %v483 = vand.u32 2147483647, %v473
    %vm484 = vcmp.eq.f32.partialorder %v483, 8.507059e+37
    %v485 = vand.u32 %v473, 2147483648
    %v486 = vor.u32 1.1754944e-38, %v485
    %v487 = vsel %vm484, %v486, %v482
    %v488 = vmul.f32 %v463, %v487
    %v489 = vmin.f32 %v488, 1.0
    %v490 = vmax.f32 %v489, -1.0
    %v491 = vadd.f32 %v210, 1.0
    %v492 = vadd.f32 %v250, 1.0
    %v493 = vadd.f32 %v290, 1.0
    %v494 = vadd.f32 %v330, 1.0
    %v495 = vadd.f32 %v370, 1.0
    %v496 = vadd.f32 %v410, 1.0
    %v497 = vadd.f32 %v450, 1.0
    %v498 = vadd.f32 %v490, 1.0
    %v499 = vmul.f32 %v155, %v491
    %v500 = vmul.f32 %v156, %v492
    %v501 = vmul.f32 %v157, %v493
    %v502 = vmul.f32 %v158, %v494
    %v503 = vmul.f32 %v159, %v495
    %v504 = vmul.f32 %v160, %v496
    %v505 = vmul.f32 %v161, %v497
    %v506 = vmul.f32 %v162, %v498
    %v507 = vld [vmem:[%s3] sm:$0xff]
    %v508 = vld [vmem:[%s3 + $0x8] sm:$0xff]
    %v509 = vld [vmem:[%s3 + $0x10] sm:$0xff]
    %v510 = vld [vmem:[%s3 + $0x18] sm:$0xff]
    %v511 = vld [vmem:[%s3 + $0x20] sm:$0xff]
    %v512 = vld [vmem:[%s3 + $0x28] sm:$0xff]
    %v513 = vld [vmem:[%s3 + $0x30] sm:$0xff]
    %v514 = vld [vmem:[%s3 + $0x38] sm:$0xff]
    %v515 = vld [vmem:[%s4] sm:$0xff]
    %v516 = vld [vmem:[%s4 + $0x8] sm:$0xff]
    %v517 = vld [vmem:[%s4 + $0x10] sm:$0xff]
    %v518 = vld [vmem:[%s4 + $0x18] sm:$0xff]
    %v519 = vld [vmem:[%s4 + $0x20] sm:$0xff]
    %v520 = vld [vmem:[%s4 + $0x28] sm:$0xff]
    %v521 = vld [vmem:[%s4 + $0x30] sm:$0xff]
    %v522 = vld [vmem:[%s4 + $0x38] sm:$0xff]
    %524 = vset.pattern.permute.xlu0 0
    %525 = vperm.xlu0 %524, %v515
    %v526 = vpop.permute.xlu0 %525
    %529 = vset.pattern.permute.xlu0 0
    %530 = vperm.xlu0 %529, %v516
    %v531 = vpop.permute.xlu0 %530
    %534 = vset.pattern.permute.xlu0 0
    %535 = vperm.xlu0 %534, %v517
    %v536 = vpop.permute.xlu0 %535
    %539 = vset.pattern.permute.xlu0 0
    %540 = vperm.xlu0 %539, %v518
    %v541 = vpop.permute.xlu0 %540
    %544 = vset.pattern.permute.xlu0 0
    %545 = vperm.xlu0 %544, %v519
    %v546 = vpop.permute.xlu0 %545
    %549 = vset.pattern.permute.xlu0 0
    %550 = vperm.xlu0 %549, %v520
    %v551 = vpop.permute.xlu0 %550
    %554 = vset.pattern.permute.xlu0 0
    %555 = vperm.xlu0 %554, %v521
    %v556 = vpop.permute.xlu0 %555
    %559 = vset.pattern.permute.xlu0 0
    %560 = vperm.xlu0 %559, %v522
    %v561 = vpop.permute.xlu0 %560
    %vm563 = vcmask 523264
    %v565 = vsel %vm563, %v507, 0
    %v568 = vsel %vm563, %v508, 0
    %v571 = vsel %vm563, %v509, 0
    %v574 = vsel %vm563, %v510, 0
    %v577 = vsel %vm563, %v511, 0
    %v580 = vsel %vm563, %v512, 0
    %v583 = vsel %vm563, %v513, 0
    %v586 = vsel %vm563, %v514, 0
    %588 = vmatpush.msra.mxu0 0.0
    %589 = vmatpush.msra.mxu0 0.0
    %590 = vmatpush.msra.mxu0 0.0
    %591 = vmatpush.msra.mxu0 0.0
    %592 = vmatpush.msra.mxu0 0.0
    %593 = vmatpush.msra.mxu0 0.0
    %594 = vmatpush.msra.mxu0 0.0
    %595 = vmatpush.msra.mxu0 0.0
    %596 = vmatpush.msra.mxu0 %v506
    %597 = vmatpush.msra.mxu0 %v505
    %598 = vmatpush.msra.mxu0 %v504
    %599 = vmatpush.msra.mxu0 %v503
    %600 = vmatpush.msra.mxu0 %v502
    %601 = vmatpush.msra.mxu0 %v501
    %602 = vmatpush.msra.mxu0 %v500
    %603 = vmatpush.msra.mxu0 %v499
    %604 = vmatmul.f32.gmra.mxu0 %v565
    %v605 = vpop.f32.mrf.mxu0
    %v606 = vadd.f32 %v526, %v605
    %607 = vmatmul.f32.gmra.mxu0 %v568
    %v608 = vpop.f32.mrf.mxu0
    %v609 = vadd.f32 %v531, %v608
    %610 = vmatmul.f32.gmra.mxu0 %v571
    %v611 = vpop.f32.mrf.mxu0
    %v612 = vadd.f32 %v536, %v611
    %613 = vmatmul.f32.gmra.mxu0 %v574
    %v614 = vpop.f32.mrf.mxu0
    %v615 = vadd.f32 %v541, %v614
    %616 = vmatmul.f32.gmra.mxu0 %v577
    %v617 = vpop.f32.mrf.mxu0
    %v618 = vadd.f32 %v546, %v617
    %619 = vmatmul.f32.gmra.mxu0 %v580
    %v620 = vpop.f32.mrf.mxu0
    %v621 = vadd.f32 %v551, %v620
    %622 = vmatmul.f32.gmra.mxu0 %v583
    %v623 = vpop.f32.mrf.mxu0
    %v624 = vadd.f32 %v556, %v623
    %625 = vmatmul.f32.gmra.mxu0 %v586
    %v626 = vpop.f32.mrf.mxu0
    %v627 = vadd.f32 %v561, %v626
    %628 = vdwg.mxu0
    %v629 = vmul.f32 %v606, 0.5
    %v630 = vmul.f32 %v609, 0.5
    %v631 = vmul.f32 %v612, 0.5
    %v632 = vmul.f32 %v615, 0.5
    %v633 = vmul.f32 %v618, 0.5
    %v634 = vmul.f32 %v621, 0.5
    %v635 = vmul.f32 %v624, 0.5
    %v636 = vmul.f32 %v627, 0.5
    %v637 = vmul.f32 %v606, 0.70710677
    %v638 = vmul.f32 %v609, 0.70710677
    %v639 = vmul.f32 %v612, 0.70710677
    %v640 = vmul.f32 %v615, 0.70710677
    %v641 = vmul.f32 %v618, 0.70710677
    %v642 = vmul.f32 %v621, 0.70710677
    %v643 = vmul.f32 %v624, 0.70710677
    %v644 = vmul.f32 %v627, 0.70710677
    %v645 = vmul.f32 %v637, %v637
    %v646 = vmin.f32 16.0, %v645
    %v647 = vmul.f32 %v646, 2.1237322e-06
    %v648 = vadd.f32 %v647, 0.00028619796
    %v649 = vmul.f32 %v646, %v648
    %v650 = vadd.f32 %v649, 0.0036580483
    %v651 = vmul.f32 %v646, %v650
    %v652 = vadd.f32 %v651, 0.05243302
    %v653 = vmul.f32 %v646, %v652
    %v654 = vadd.f32 %v653, 0.18741608
    %v655 = vmul.f32 %v646, %v654
    %v656 = vadd.f32 %v655, 1.1283791
    %v657 = vmul.f32 %v637, %v656
    %v658 = vmul.f32 %v646, 3.8918573e-05
    %v659 = vadd.f32 %v658, 0.001143296
    %v660 = vmul.f32 %v646, %v659
    %v661 = vadd.f32 %v660, 0.014752088
    %v662 = vmul.f32 %v646, %v661
    %v663 = vadd.f32 %v662, 0.112945676
    %v664 = vmul.f32 %v646, %v663
    %v665 = vadd.f32 %v664, 0.4994258
    %v666 = vmul.f32 %v646, %v665
    %v667 = vadd.f32 %v666, 1.0
    %v668 = vrcp.pop %v667
    %v669 = vmul.f32 %v667, %v668
    %v670 = vsub.f32 1.0, %v669
    %v671 = vmul.f32 %v668, %v670
    %v672 = vadd.f32 %v668, %v671
    %vm673 = vweird.f32 %v667
    %vm674 = vweird.f32 %v668
    %vm675 = vmor %vm673, %vm674
    %v676 = vsel %vm675, %v668, %v672
    %v677 = vand.u32 2147483647, %v667
    %vm678 = vcmp.eq.f32.partialorder %v677, 8.507059e+37
    %v679 = vand.u32 %v667, 2147483648
    %v680 = vor.u32 1.1754944e-38, %v679
    %v681 = vsel %vm678, %v680, %v676
    %v682 = vmul.f32 %v657, %v681
    %v683 = vmin.f32 %v682, 1.0
    %v684 = vmax.f32 %v683, -1.0
    %v685 = vmul.f32 %v638, %v638
    %v686 = vmin.f32 16.0, %v685
    %v687 = vmul.f32 %v686, 2.1237322e-06
    %v688 = vadd.f32 %v687, 0.00028619796
    %v689 = vmul.f32 %v686, %v688
    %v690 = vadd.f32 %v689, 0.0036580483
    %v691 = vmul.f32 %v686, %v690
    %v692 = vadd.f32 %v691, 0.05243302
    %v693 = vmul.f32 %v686, %v692
    %v694 = vadd.f32 %v693, 0.18741608
    %v695 = vmul.f32 %v686, %v694
    %v696 = vadd.f32 %v695, 1.1283791
    %v697 = vmul.f32 %v638, %v696
    %v698 = vmul.f32 %v686, 3.8918573e-05
    %v699 = vadd.f32 %v698, 0.001143296
    %v700 = vmul.f32 %v686, %v699
    %v701 = vadd.f32 %v700, 0.014752088
    %v702 = vmul.f32 %v686, %v701
    %v703 = vadd.f32 %v702, 0.112945676
    %v704 = vmul.f32 %v686, %v703
    %v705 = vadd.f32 %v704, 0.4994258
    %v706 = vmul.f32 %v686, %v705
    %v707 = vadd.f32 %v706, 1.0
    %v708 = vrcp.pop %v707
    %v709 = vmul.f32 %v707, %v708
    %v710 = vsub.f32 1.0, %v709
    %v711 = vmul.f32 %v708, %v710
    %v712 = vadd.f32 %v708, %v711
    %vm713 = vweird.f32 %v707
    %vm714 = vweird.f32 %v708
    %vm715 = vmor %vm713, %vm714
    %v716 = vsel %vm715, %v708, %v712
    %v717 = vand.u32 2147483647, %v707
    %vm718 = vcmp.eq.f32.partialorder %v717, 8.507059e+37
    %v719 = vand.u32 %v707, 2147483648
    %v720 = vor.u32 1.1754944e-38, %v719
    %v721 = vsel %vm718, %v720, %v716
    %v722 = vmul.f32 %v697, %v721
    %v723 = vmin.f32 %v722, 1.0
    %v724 = vmax.f32 %v723, -1.0
    %v725 = vmul.f32 %v639, %v639
    %v726 = vmin.f32 16.0, %v725
    %v727 = vmul.f32 %v726, 2.1237322e-06
    %v728 = vadd.f32 %v727, 0.00028619796
    %v729 = vmul.f32 %v726, %v728
    %v730 = vadd.f32 %v729, 0.0036580483
    %v731 = vmul.f32 %v726, %v730
    %v732 = vadd.f32 %v731, 0.05243302
    %v733 = vmul.f32 %v726, %v732
    %v734 = vadd.f32 %v733, 0.18741608
    %v735 = vmul.f32 %v726, %v734
    %v736 = vadd.f32 %v735, 1.1283791
    %v737 = vmul.f32 %v639, %v736
    %v738 = vmul.f32 %v726, 3.8918573e-05
    %v739 = vadd.f32 %v738, 0.001143296
    %v740 = vmul.f32 %v726, %v739
    %v741 = vadd.f32 %v740, 0.014752088
    %v742 = vmul.f32 %v726, %v741
    %v743 = vadd.f32 %v742, 0.112945676
    %v744 = vmul.f32 %v726, %v743
    %v745 = vadd.f32 %v744, 0.4994258
    %v746 = vmul.f32 %v726, %v745
    %v747 = vadd.f32 %v746, 1.0
    %v748 = vrcp.pop %v747
    %v749 = vmul.f32 %v747, %v748
    %v750 = vsub.f32 1.0, %v749
    %v751 = vmul.f32 %v748, %v750
    %v752 = vadd.f32 %v748, %v751
    %vm753 = vweird.f32 %v747
    %vm754 = vweird.f32 %v748
    %vm755 = vmor %vm753, %vm754
    %v756 = vsel %vm755, %v748, %v752
    %v757 = vand.u32 2147483647, %v747
    %vm758 = vcmp.eq.f32.partialorder %v757, 8.507059e+37
    %v759 = vand.u32 %v747, 2147483648
    %v760 = vor.u32 1.1754944e-38, %v759
    %v761 = vsel %vm758, %v760, %v756
    %v762 = vmul.f32 %v737, %v761
    %v763 = vmin.f32 %v762, 1.0
    %v764 = vmax.f32 %v763, -1.0
    %v765 = vmul.f32 %v640, %v640
    %v766 = vmin.f32 16.0, %v765
    %v767 = vmul.f32 %v766, 2.1237322e-06
    %v768 = vadd.f32 %v767, 0.00028619796
    %v769 = vmul.f32 %v766, %v768
    %v770 = vadd.f32 %v769, 0.0036580483
    %v771 = vmul.f32 %v766, %v770
    %v772 = vadd.f32 %v771, 0.05243302
    %v773 = vmul.f32 %v766, %v772
    %v774 = vadd.f32 %v773, 0.18741608
    %v775 = vmul.f32 %v766, %v774
    %v776 = vadd.f32 %v775, 1.1283791
    %v777 = vmul.f32 %v640, %v776
    %v778 = vmul.f32 %v766, 3.8918573e-05
    %v779 = vadd.f32 %v778, 0.001143296
    %v780 = vmul.f32 %v766, %v779
    %v781 = vadd.f32 %v780, 0.014752088
    %v782 = vmul.f32 %v766, %v781
    %v783 = vadd.f32 %v782, 0.112945676
    %v784 = vmul.f32 %v766, %v783
    %v785 = vadd.f32 %v784, 0.4994258
    %v786 = vmul.f32 %v766, %v785
    %v787 = vadd.f32 %v786, 1.0
    %v788 = vrcp.pop %v787
    %v789 = vmul.f32 %v787, %v788
    %v790 = vsub.f32 1.0, %v789
    %v791 = vmul.f32 %v788, %v790
    %v792 = vadd.f32 %v788, %v791
    %vm793 = vweird.f32 %v787
    %vm794 = vweird.f32 %v788
    %vm795 = vmor %vm793, %vm794
    %v796 = vsel %vm795, %v788, %v792
    %v797 = vand.u32 2147483647, %v787
    %vm798 = vcmp.eq.f32.partialorder %v797, 8.507059e+37
    %v799 = vand.u32 %v787, 2147483648
    %v800 = vor.u32 1.1754944e-38, %v799
    %v801 = vsel %vm798, %v800, %v796
    %v802 = vmul.f32 %v777, %v801
    %v803 = vmin.f32 %v802, 1.0
    %v804 = vmax.f32 %v803, -1.0
    %v805 = vmul.f32 %v641, %v641
    %v806 = vmin.f32 16.0, %v805
    %v807 = vmul.f32 %v806, 2.1237322e-06
    %v808 = vadd.f32 %v807, 0.00028619796
    %v809 = vmul.f32 %v806, %v808
    %v810 = vadd.f32 %v809, 0.0036580483
    %v811 = vmul.f32 %v806, %v810
    %v812 = vadd.f32 %v811, 0.05243302
    %v813 = vmul.f32 %v806, %v812
    %v814 = vadd.f32 %v813, 0.18741608
    %v815 = vmul.f32 %v806, %v814
    %v816 = vadd.f32 %v815, 1.1283791
    %v817 = vmul.f32 %v641, %v816
    %v818 = vmul.f32 %v806, 3.8918573e-05
    %v819 = vadd.f32 %v818, 0.001143296
    %v820 = vmul.f32 %v806, %v819
    %v821 = vadd.f32 %v820, 0.014752088
    %v822 = vmul.f32 %v806, %v821
    %v823 = vadd.f32 %v822, 0.112945676
    %v824 = vmul.f32 %v806, %v823
    %v825 = vadd.f32 %v824, 0.4994258
    %v826 = vmul.f32 %v806, %v825
    %v827 = vadd.f32 %v826, 1.0
    %v828 = vrcp.pop %v827
    %v829 = vmul.f32 %v827, %v828
    %v830 = vsub.f32 1.0, %v829
    %v831 = vmul.f32 %v828, %v830
    %v832 = vadd.f32 %v828, %v831
    %vm833 = vweird.f32 %v827
    %vm834 = vweird.f32 %v828
    %vm835 = vmor %vm833, %vm834
    %v836 = vsel %vm835, %v828, %v832
    %v837 = vand.u32 2147483647, %v827
    %vm838 = vcmp.eq.f32.partialorder %v837, 8.507059e+37
    %v839 = vand.u32 %v827, 2147483648
    %v840 = vor.u32 1.1754944e-38, %v839
    %v841 = vsel %vm838, %v840, %v836
    %v842 = vmul.f32 %v817, %v841
    %v843 = vmin.f32 %v842, 1.0
    %v844 = vmax.f32 %v843, -1.0
    %v845 = vmul.f32 %v642, %v642
    %v846 = vmin.f32 16.0, %v845
    %v847 = vmul.f32 %v846, 2.1237322e-06
    %v848 = vadd.f32 %v847, 0.00028619796
    %v849 = vmul.f32 %v846, %v848
    %v850 = vadd.f32 %v849, 0.0036580483
    %v851 = vmul.f32 %v846, %v850
    %v852 = vadd.f32 %v851, 0.05243302
    %v853 = vmul.f32 %v846, %v852
    %v854 = vadd.f32 %v853, 0.18741608
    %v855 = vmul.f32 %v846, %v854
    %v856 = vadd.f32 %v855, 1.1283791
    %v857 = vmul.f32 %v642, %v856
    %v858 = vmul.f32 %v846, 3.8918573e-05
    %v859 = vadd.f32 %v858, 0.001143296
    %v860 = vmul.f32 %v846, %v859
    %v861 = vadd.f32 %v860, 0.014752088
    %v862 = vmul.f32 %v846, %v861
    %v863 = vadd.f32 %v862, 0.112945676
    %v864 = vmul.f32 %v846, %v863
    %v865 = vadd.f32 %v864, 0.4994258
    %v866 = vmul.f32 %v846, %v865
    %v867 = vadd.f32 %v866, 1.0
    %v868 = vrcp.pop %v867
    %v869 = vmul.f32 %v867, %v868
    %v870 = vsub.f32 1.0, %v869
    %v871 = vmul.f32 %v868, %v870
    %v872 = vadd.f32 %v868, %v871
    %vm873 = vweird.f32 %v867
    %vm874 = vweird.f32 %v868
    %vm875 = vmor %vm873, %vm874
    %v876 = vsel %vm875, %v868, %v872
    %v877 = vand.u32 2147483647, %v867
    %vm878 = vcmp.eq.f32.partialorder %v877, 8.507059e+37
    %v879 = vand.u32 %v867, 2147483648
    %v880 = vor.u32 1.1754944e-38, %v879
    %v881 = vsel %vm878, %v880, %v876
    %v882 = vmul.f32 %v857, %v881
    %v883 = vmin.f32 %v882, 1.0
    %v884 = vmax.f32 %v883, -1.0
    %v885 = vmul.f32 %v643, %v643
    %v886 = vmin.f32 16.0, %v885
    %v887 = vmul.f32 %v886, 2.1237322e-06
    %v888 = vadd.f32 %v887, 0.00028619796
    %v889 = vmul.f32 %v886, %v888
    %v890 = vadd.f32 %v889, 0.0036580483
    %v891 = vmul.f32 %v886, %v890
    %v892 = vadd.f32 %v891, 0.05243302
    %v893 = vmul.f32 %v886, %v892
    %v894 = vadd.f32 %v893, 0.18741608
    %v895 = vmul.f32 %v886, %v894
    %v896 = vadd.f32 %v895, 1.1283791
    %v897 = vmul.f32 %v643, %v896
    %v898 = vmul.f32 %v886, 3.8918573e-05
    %v899 = vadd.f32 %v898, 0.001143296
    %v900 = vmul.f32 %v886, %v899
    %v901 = vadd.f32 %v900, 0.014752088
    %v902 = vmul.f32 %v886, %v901
    %v903 = vadd.f32 %v902, 0.112945676
    %v904 = vmul.f32 %v886, %v903
    %v905 = vadd.f32 %v904, 0.4994258
    %v906 = vmul.f32 %v886, %v905
    %v907 = vadd.f32 %v906, 1.0
    %v908 = vrcp.pop %v907
    %v909 = vmul.f32 %v907, %v908
    %v910 = vsub.f32 1.0, %v909
    %v911 = vmul.f32 %v908, %v910
    %v912 = vadd.f32 %v908, %v911
    %vm913 = vweird.f32 %v907
    %vm914 = vweird.f32 %v908
    %vm915 = vmor %vm913, %vm914
    %v916 = vsel %vm915, %v908, %v912
    %v917 = vand.u32 2147483647, %v907
    %vm918 = vcmp.eq.f32.partialorder %v917, 8.507059e+37
    %v919 = vand.u32 %v907, 2147483648
    %v920 = vor.u32 1.1754944e-38, %v919
    %v921 = vsel %vm918, %v920, %v916
    %v922 = vmul.f32 %v897, %v921
    %v923 = vmin.f32 %v922, 1.0
    %v924 = vmax.f32 %v923, -1.0
    %v925 = vmul.f32 %v644, %v644
    %v926 = vmin.f32 16.0, %v925
    %v927 = vmul.f32 %v926, 2.1237322e-06
    %v928 = vadd.f32 %v927, 0.00028619796
    %v929 = vmul.f32 %v926, %v928
    %v930 = vadd.f32 %v929, 0.0036580483
    %v931 = vmul.f32 %v926, %v930
    %v932 = vadd.f32 %v931, 0.05243302
    %v933 = vmul.f32 %v926, %v932
    %v934 = vadd.f32 %v933, 0.18741608
    %v935 = vmul.f32 %v926, %v934
    %v936 = vadd.f32 %v935, 1.1283791
    %v937 = vmul.f32 %v644, %v936
    %v938 = vmul.f32 %v926, 3.8918573e-05
    %v939 = vadd.f32 %v938, 0.001143296
    %v940 = vmul.f32 %v926, %v939
    %v941 = vadd.f32 %v940, 0.014752088
    %v942 = vmul.f32 %v926, %v941
    %v943 = vadd.f32 %v942, 0.112945676
    %v944 = vmul.f32 %v926, %v943
    %v945 = vadd.f32 %v944, 0.4994258
    %v946 = vmul.f32 %v926, %v945
    %v947 = vadd.f32 %v946, 1.0
    %v948 = vrcp.pop %v947
    %v949 = vmul.f32 %v947, %v948
    %v950 = vsub.f32 1.0, %v949
    %v951 = vmul.f32 %v948, %v950
    %v952 = vadd.f32 %v948, %v951
    %vm953 = vweird.f32 %v947
    %vm954 = vweird.f32 %v948
    %vm955 = vmor %vm953, %vm954
    %v956 = vsel %vm955, %v948, %v952
    %v957 = vand.u32 2147483647, %v947
    %vm958 = vcmp.eq.f32.partialorder %v957, 8.507059e+37
    %v959 = vand.u32 %v947, 2147483648
    %v960 = vor.u32 1.1754944e-38, %v959
    %v961 = vsel %vm958, %v960, %v956
    %v962 = vmul.f32 %v937, %v961
    %v963 = vmin.f32 %v962, 1.0
    %v964 = vmax.f32 %v963, -1.0
    %v965 = vadd.f32 %v684, 1.0
    %v966 = vadd.f32 %v724, 1.0
    %v967 = vadd.f32 %v764, 1.0
    %v968 = vadd.f32 %v804, 1.0
    %v969 = vadd.f32 %v844, 1.0
    %v970 = vadd.f32 %v884, 1.0
    %v971 = vadd.f32 %v924, 1.0
    %v972 = vadd.f32 %v964, 1.0
    %v973 = vmul.f32 %v629, %v965
    %v974 = vmul.f32 %v630, %v966
    %v975 = vmul.f32 %v631, %v967
    %v976 = vmul.f32 %v632, %v968
    %v977 = vmul.f32 %v633, %v969
    %v978 = vmul.f32 %v634, %v970
    %v979 = vmul.f32 %v635, %v971
    %v980 = vmul.f32 %v636, %v972
    %s981 = scalar_lea.vmem %s3, 64
    %v982 = vld [vmem:[%s981] sm:$0xff]
    %v983 = vld [vmem:[%s981 + $0x8] sm:$0xff]
    %v984 = vld [vmem:[%s981 + $0x10] sm:$0xff]
    %v985 = vld [vmem:[%s981 + $0x18] sm:$0xff]
    %v986 = vld [vmem:[%s981 + $0x20] sm:$0xff]
    %v987 = vld [vmem:[%s981 + $0x28] sm:$0xff]
    %v988 = vld [vmem:[%s981 + $0x30] sm:$0xff]
    %v989 = vld [vmem:[%s981 + $0x38] sm:$0xff]
    %s990 = scalar_lea.vmem %s4, 64
    %v991 = vld [vmem:[%s990] sm:$0xff]
    %v992 = vld [vmem:[%s990 + $0x8] sm:$0xff]
    %v993 = vld [vmem:[%s990 + $0x10] sm:$0xff]
    %v994 = vld [vmem:[%s990 + $0x18] sm:$0xff]
    %v995 = vld [vmem:[%s990 + $0x20] sm:$0xff]
    %v996 = vld [vmem:[%s990 + $0x28] sm:$0xff]
    %v997 = vld [vmem:[%s990 + $0x30] sm:$0xff]
    %v998 = vld [vmem:[%s990 + $0x38] sm:$0xff]
    %1000 = vset.pattern.permute.xlu0 0
    %1001 = vperm.xlu0 %1000, %v991
    %v1002 = vpop.permute.xlu0 %1001
    %1005 = vset.pattern.permute.xlu0 0
    %1006 = vperm.xlu0 %1005, %v992
    %v1007 = vpop.permute.xlu0 %1006
    %1010 = vset.pattern.permute.xlu0 0
    %1011 = vperm.xlu0 %1010, %v993
    %v1012 = vpop.permute.xlu0 %1011
    %1015 = vset.pattern.permute.xlu0 0
    %1016 = vperm.xlu0 %1015, %v994
    %v1017 = vpop.permute.xlu0 %1016
    %1020 = vset.pattern.permute.xlu0 0
    %1021 = vperm.xlu0 %1020, %v995
    %v1022 = vpop.permute.xlu0 %1021
    %1025 = vset.pattern.permute.xlu0 0
    %1026 = vperm.xlu0 %1025, %v996
    %v1027 = vpop.permute.xlu0 %1026
    %1030 = vset.pattern.permute.xlu0 0
    %1031 = vperm.xlu0 %1030, %v997
    %v1032 = vpop.permute.xlu0 %1031
    %1035 = vset.pattern.permute.xlu0 0
    %1036 = vperm.xlu0 %1035, %v998
    %v1037 = vpop.permute.xlu0 %1036
    %v1040 = vsel %vm563, %v982, 0
    %v1043 = vsel %vm563, %v983, 0
    %v1046 = vsel %vm563, %v984, 0
    %v1049 = vsel %vm563, %v985, 0
    %v1052 = vsel %vm563, %v986, 0
    %v1055 = vsel %vm563, %v987, 0
    %v1058 = vsel %vm563, %v988, 0
    %v1061 = vsel %vm563, %v989, 0
    %1063 = vmatpush.msra.mxu0 0.0
    %1064 = vmatpush.msra.mxu0 0.0
    %1065 = vmatpush.msra.mxu0 0.0
    %1066 = vmatpush.msra.mxu0 0.0
    %1067 = vmatpush.msra.mxu0 0.0
    %1068 = vmatpush.msra.mxu0 0.0
    %1069 = vmatpush.msra.mxu0 0.0
    %1070 = vmatpush.msra.mxu0 0.0
    %1071 = vmatpush.msra.mxu0 %v980
    %1072 = vmatpush.msra.mxu0 %v979
    %1073 = vmatpush.msra.mxu0 %v978
    %1074 = vmatpush.msra.mxu0 %v977
    %1075 = vmatpush.msra.mxu0 %v976
    %1076 = vmatpush.msra.mxu0 %v975
    %1077 = vmatpush.msra.mxu0 %v974
    %1078 = vmatpush.msra.mxu0 %v973
    %1079 = vmatmul.f32.gmra.mxu0 %v1040
    %v1080 = vpop.f32.mrf.mxu0
    %v1081 = vadd.f32 %v1002, %v1080
    %1082 = vmatmul.f32.gmra.mxu0 %v1043
    %v1083 = vpop.f32.mrf.mxu0
    %v1084 = vadd.f32 %v1007, %v1083
    %1085 = vmatmul.f32.gmra.mxu0 %v1046
    %v1086 = vpop.f32.mrf.mxu0
    %v1087 = vadd.f32 %v1012, %v1086
    %1088 = vmatmul.f32.gmra.mxu0 %v1049
    %v1089 = vpop.f32.mrf.mxu0
    %v1090 = vadd.f32 %v1017, %v1089
    %1091 = vmatmul.f32.gmra.mxu0 %v1052
    %v1092 = vpop.f32.mrf.mxu0
    %v1093 = vadd.f32 %v1022, %v1092
    %1094 = vmatmul.f32.gmra.mxu0 %v1055
    %v1095 = vpop.f32.mrf.mxu0
    %v1096 = vadd.f32 %v1027, %v1095
    %1097 = vmatmul.f32.gmra.mxu0 %v1058
    %v1098 = vpop.f32.mrf.mxu0
    %v1099 = vadd.f32 %v1032, %v1098
    %1100 = vmatmul.f32.gmra.mxu0 %v1061
    %v1101 = vpop.f32.mrf.mxu0
    %v1102 = vadd.f32 %v1037, %v1101
    %1103 = vdwg.mxu0
    %v1104 = vmul.f32 %v1081, 0.5
    %v1105 = vmul.f32 %v1084, 0.5
    %v1106 = vmul.f32 %v1087, 0.5
    %v1107 = vmul.f32 %v1090, 0.5
    %v1108 = vmul.f32 %v1093, 0.5
    %v1109 = vmul.f32 %v1096, 0.5
    %v1110 = vmul.f32 %v1099, 0.5
    %v1111 = vmul.f32 %v1102, 0.5
    %v1112 = vmul.f32 %v1081, 0.70710677
    %v1113 = vmul.f32 %v1084, 0.70710677
    %v1114 = vmul.f32 %v1087, 0.70710677
    %v1115 = vmul.f32 %v1090, 0.70710677
    %v1116 = vmul.f32 %v1093, 0.70710677
    %v1117 = vmul.f32 %v1096, 0.70710677
    %v1118 = vmul.f32 %v1099, 0.70710677
    %v1119 = vmul.f32 %v1102, 0.70710677
    %v1120 = vmul.f32 %v1112, %v1112
    %v1121 = vmin.f32 16.0, %v1120
    %v1122 = vmul.f32 %v1121, 2.1237322e-06
    %v1123 = vadd.f32 %v1122, 0.00028619796
    %v1124 = vmul.f32 %v1121, %v1123
    %v1125 = vadd.f32 %v1124, 0.0036580483
    %v1126 = vmul.f32 %v1121, %v1125
    %v1127 = vadd.f32 %v1126, 0.05243302
    %v1128 = vmul.f32 %v1121, %v1127
    %v1129 = vadd.f32 %v1128, 0.18741608
    %v1130 = vmul.f32 %v1121, %v1129
    %v1131 = vadd.f32 %v1130, 1.1283791
    %v1132 = vmul.f32 %v1112, %v1131
    %v1133 = vmul.f32 %v1121, 3.8918573e-05
    %v1134 = vadd.f32 %v1133, 0.001143296
    %v1135 = vmul.f32 %v1121, %v1134
    %v1136 = vadd.f32 %v1135, 0.014752088
    %v1137 = vmul.f32 %v1121, %v1136
    %v1138 = vadd.f32 %v1137, 0.112945676
    %v1139 = vmul.f32 %v1121, %v1138
    %v1140 = vadd.f32 %v1139, 0.4994258
    %v1141 = vmul.f32 %v1121, %v1140
    %v1142 = vadd.f32 %v1141, 1.0
    %v1143 = vrcp.pop %v1142
    %v1144 = vmul.f32 %v1142, %v1143
    %v1145 = vsub.f32 1.0, %v1144
    %v1146 = vmul.f32 %v1143, %v1145
    %v1147 = vadd.f32 %v1143, %v1146
    %vm1148 = vweird.f32 %v1142
    %vm1149 = vweird.f32 %v1143
    %vm1150 = vmor %vm1148, %vm1149
    %v1151 = vsel %vm1150, %v1143, %v1147
    %v1152 = vand.u32 2147483647, %v1142
    %vm1153 = vcmp.eq.f32.partialorder %v1152, 8.507059e+37
    %v1154 = vand.u32 %v1142, 2147483648
    %v1155 = vor.u32 1.1754944e-38, %v1154
    %v1156 = vsel %vm1153, %v1155, %v1151
    %v1157 = vmul.f32 %v1132, %v1156
    %v1158 = vmin.f32 %v1157, 1.0
    %v1159 = vmax.f32 %v1158, -1.0
    %v1160 = vmul.f32 %v1113, %v1113
    %v1161 = vmin.f32 16.0, %v1160
    %v1162 = vmul.f32 %v1161, 2.1237322e-06
    %v1163 = vadd.f32 %v1162, 0.00028619796
    %v1164 = vmul.f32 %v1161, %v1163
    %v1165 = vadd.f32 %v1164, 0.0036580483
    %v1166 = vmul.f32 %v1161, %v1165
    %v1167 = vadd.f32 %v1166, 0.05243302
    %v1168 = vmul.f32 %v1161, %v1167
    %v1169 = vadd.f32 %v1168, 0.18741608
    %v1170 = vmul.f32 %v1161, %v1169
    %v1171 = vadd.f32 %v1170, 1.1283791
    %v1172 = vmul.f32 %v1113, %v1171
    %v1173 = vmul.f32 %v1161, 3.8918573e-05
    %v1174 = vadd.f32 %v1173, 0.001143296
    %v1175 = vmul.f32 %v1161, %v1174
    %v1176 = vadd.f32 %v1175, 0.014752088
    %v1177 = vmul.f32 %v1161, %v1176
    %v1178 = vadd.f32 %v1177, 0.112945676
    %v1179 = vmul.f32 %v1161, %v1178
    %v1180 = vadd.f32 %v1179, 0.4994258
    %v1181 = vmul.f32 %v1161, %v1180
    %v1182 = vadd.f32 %v1181, 1.0
    %v1183 = vrcp.pop %v1182
    %v1184 = vmul.f32 %v1182, %v1183
    %v1185 = vsub.f32 1.0, %v1184
    %v1186 = vmul.f32 %v1183, %v1185
    %v1187 = vadd.f32 %v1183, %v1186
    %vm1188 = vweird.f32 %v1182
    %vm1189 = vweird.f32 %v1183
    %vm1190 = vmor %vm1188, %vm1189
    %v1191 = vsel %vm1190, %v1183, %v1187
    %v1192 = vand.u32 2147483647, %v1182
    %vm1193 = vcmp.eq.f32.partialorder %v1192, 8.507059e+37
    %v1194 = vand.u32 %v1182, 2147483648
    %v1195 = vor.u32 1.1754944e-38, %v1194
    %v1196 = vsel %vm1193, %v1195, %v1191
    %v1197 = vmul.f32 %v1172, %v1196
    %v1198 = vmin.f32 %v1197, 1.0
    %v1199 = vmax.f32 %v1198, -1.0
    %v1200 = vmul.f32 %v1114, %v1114
    %v1201 = vmin.f32 16.0, %v1200
    %v1202 = vmul.f32 %v1201, 2.1237322e-06
    %v1203 = vadd.f32 %v1202, 0.00028619796
    %v1204 = vmul.f32 %v1201, %v1203
    %v1205 = vadd.f32 %v1204, 0.0036580483
    %v1206 = vmul.f32 %v1201, %v1205
    %v1207 = vadd.f32 %v1206, 0.05243302
    %v1208 = vmul.f32 %v1201, %v1207
    %v1209 = vadd.f32 %v1208, 0.18741608
    %v1210 = vmul.f32 %v1201, %v1209
    %v1211 = vadd.f32 %v1210, 1.1283791
    %v1212 = vmul.f32 %v1114, %v1211
    %v1213 = vmul.f32 %v1201, 3.8918573e-05
    %v1214 = vadd.f32 %v1213, 0.001143296
    %v1215 = vmul.f32 %v1201, %v1214
    %v1216 = vadd.f32 %v1215, 0.014752088
    %v1217 = vmul.f32 %v1201, %v1216
    %v1218 = vadd.f32 %v1217, 0.112945676
    %v1219 = vmul.f32 %v1201, %v1218
    %v1220 = vadd.f32 %v1219, 0.4994258
    %v1221 = vmul.f32 %v1201, %v1220
    %v1222 = vadd.f32 %v1221, 1.0
    %v1223 = vrcp.pop %v1222
    %v1224 = vmul.f32 %v1222, %v1223
    %v1225 = vsub.f32 1.0, %v1224
    %v1226 = vmul.f32 %v1223, %v1225
    %v1227 = vadd.f32 %v1223, %v1226
    %vm1228 = vweird.f32 %v1222
    %vm1229 = vweird.f32 %v1223
    %vm1230 = vmor %vm1228, %vm1229
    %v1231 = vsel %vm1230, %v1223, %v1227
    %v1232 = vand.u32 2147483647, %v1222
    %vm1233 = vcmp.eq.f32.partialorder %v1232, 8.507059e+37
    %v1234 = vand.u32 %v1222, 2147483648
    %v1235 = vor.u32 1.1754944e-38, %v1234
    %v1236 = vsel %vm1233, %v1235, %v1231
    %v1237 = vmul.f32 %v1212, %v1236
    %v1238 = vmin.f32 %v1237, 1.0
    %v1239 = vmax.f32 %v1238, -1.0
    %v1240 = vmul.f32 %v1115, %v1115
    %v1241 = vmin.f32 16.0, %v1240
    %v1242 = vmul.f32 %v1241, 2.1237322e-06
    %v1243 = vadd.f32 %v1242, 0.00028619796
    %v1244 = vmul.f32 %v1241, %v1243
    %v1245 = vadd.f32 %v1244, 0.0036580483
    %v1246 = vmul.f32 %v1241, %v1245
    %v1247 = vadd.f32 %v1246, 0.05243302
    %v1248 = vmul.f32 %v1241, %v1247
    %v1249 = vadd.f32 %v1248, 0.18741608
    %v1250 = vmul.f32 %v1241, %v1249
    %v1251 = vadd.f32 %v1250, 1.1283791
    %v1252 = vmul.f32 %v1115, %v1251
    %v1253 = vmul.f32 %v1241, 3.8918573e-05
    %v1254 = vadd.f32 %v1253, 0.001143296
    %v1255 = vmul.f32 %v1241, %v1254
    %v1256 = vadd.f32 %v1255, 0.014752088
    %v1257 = vmul.f32 %v1241, %v1256
    %v1258 = vadd.f32 %v1257, 0.112945676
    %v1259 = vmul.f32 %v1241, %v1258
    %v1260 = vadd.f32 %v1259, 0.4994258
    %v1261 = vmul.f32 %v1241, %v1260
    %v1262 = vadd.f32 %v1261, 1.0
    %v1263 = vrcp.pop %v1262
    %v1264 = vmul.f32 %v1262, %v1263
    %v1265 = vsub.f32 1.0, %v1264
    %v1266 = vmul.f32 %v1263, %v1265
    %v1267 = vadd.f32 %v1263, %v1266
    %vm1268 = vweird.f32 %v1262
    %vm1269 = vweird.f32 %v1263
    %vm1270 = vmor %vm1268, %vm1269
    %v1271 = vsel %vm1270, %v1263, %v1267
    %v1272 = vand.u32 2147483647, %v1262
    %vm1273 = vcmp.eq.f32.partialorder %v1272, 8.507059e+37
    %v1274 = vand.u32 %v1262, 2147483648
    %v1275 = vor.u32 1.1754944e-38, %v1274
    %v1276 = vsel %vm1273, %v1275, %v1271
    %v1277 = vmul.f32 %v1252, %v1276
    %v1278 = vmin.f32 %v1277, 1.0
    %v1279 = vmax.f32 %v1278, -1.0
    %v1280 = vmul.f32 %v1116, %v1116
    %v1281 = vmin.f32 16.0, %v1280
    %v1282 = vmul.f32 %v1281, 2.1237322e-06
    %v1283 = vadd.f32 %v1282, 0.00028619796
    %v1284 = vmul.f32 %v1281, %v1283
    %v1285 = vadd.f32 %v1284, 0.0036580483
    %v1286 = vmul.f32 %v1281, %v1285
    %v1287 = vadd.f32 %v1286, 0.05243302
    %v1288 = vmul.f32 %v1281, %v1287
    %v1289 = vadd.f32 %v1288, 0.18741608
    %v1290 = vmul.f32 %v1281, %v1289
    %v1291 = vadd.f32 %v1290, 1.1283791
    %v1292 = vmul.f32 %v1116, %v1291
    %v1293 = vmul.f32 %v1281, 3.8918573e-05
    %v1294 = vadd.f32 %v1293, 0.001143296
    %v1295 = vmul.f32 %v1281, %v1294
    %v1296 = vadd.f32 %v1295, 0.014752088
    %v1297 = vmul.f32 %v1281, %v1296
    %v1298 = vadd.f32 %v1297, 0.112945676
    %v1299 = vmul.f32 %v1281, %v1298
    %v1300 = vadd.f32 %v1299, 0.4994258
    %v1301 = vmul.f32 %v1281, %v1300
    %v1302 = vadd.f32 %v1301, 1.0
    %v1303 = vrcp.pop %v1302
    %v1304 = vmul.f32 %v1302, %v1303
    %v1305 = vsub.f32 1.0, %v1304
    %v1306 = vmul.f32 %v1303, %v1305
    %v1307 = vadd.f32 %v1303, %v1306
    %vm1308 = vweird.f32 %v1302
    %vm1309 = vweird.f32 %v1303
    %vm1310 = vmor %vm1308, %vm1309
    %v1311 = vsel %vm1310, %v1303, %v1307
    %v1312 = vand.u32 2147483647, %v1302
    %vm1313 = vcmp.eq.f32.partialorder %v1312, 8.507059e+37
    %v1314 = vand.u32 %v1302, 2147483648
    %v1315 = vor.u32 1.1754944e-38, %v1314
    %v1316 = vsel %vm1313, %v1315, %v1311
    %v1317 = vmul.f32 %v1292, %v1316
    %v1318 = vmin.f32 %v1317, 1.0
    %v1319 = vmax.f32 %v1318, -1.0
    %v1320 = vmul.f32 %v1117, %v1117
    %v1321 = vmin.f32 16.0, %v1320
    %v1322 = vmul.f32 %v1321, 2.1237322e-06
    %v1323 = vadd.f32 %v1322, 0.00028619796
    %v1324 = vmul.f32 %v1321, %v1323
    %v1325 = vadd.f32 %v1324, 0.0036580483
    %v1326 = vmul.f32 %v1321, %v1325
    %v1327 = vadd.f32 %v1326, 0.05243302
    %v1328 = vmul.f32 %v1321, %v1327
    %v1329 = vadd.f32 %v1328, 0.18741608
    %v1330 = vmul.f32 %v1321, %v1329
    %v1331 = vadd.f32 %v1330, 1.1283791
    %v1332 = vmul.f32 %v1117, %v1331
    %v1333 = vmul.f32 %v1321, 3.8918573e-05
    %v1334 = vadd.f32 %v1333, 0.001143296
    %v1335 = vmul.f32 %v1321, %v1334
    %v1336 = vadd.f32 %v1335, 0.014752088
    %v1337 = vmul.f32 %v1321, %v1336
    %v1338 = vadd.f32 %v1337, 0.112945676
    %v1339 = vmul.f32 %v1321, %v1338
    %v1340 = vadd.f32 %v1339, 0.4994258
    %v1341 = vmul.f32 %v1321, %v1340
    %v1342 = vadd.f32 %v1341, 1.0
    %v1343 = vrcp.pop %v1342
    %v1344 = vmul.f32 %v1342, %v1343
    %v1345 = vsub.f32 1.0, %v1344
    %v1346 = vmul.f32 %v1343, %v1345
    %v1347 = vadd.f32 %v1343, %v1346
    %vm1348 = vweird.f32 %v1342
    %vm1349 = vweird.f32 %v1343
    %vm1350 = vmor %vm1348, %vm1349
    %v1351 = vsel %vm1350, %v1343, %v1347
    %v1352 = vand.u32 2147483647, %v1342
    %vm1353 = vcmp.eq.f32.partialorder %v1352, 8.507059e+37
    %v1354 = vand.u32 %v1342, 2147483648
    %v1355 = vor.u32 1.1754944e-38, %v1354
    %v1356 = vsel %vm1353, %v1355, %v1351
    %v1357 = vmul.f32 %v1332, %v1356
    %v1358 = vmin.f32 %v1357, 1.0
    %v1359 = vmax.f32 %v1358, -1.0
    %v1360 = vmul.f32 %v1118, %v1118
    %v1361 = vmin.f32 16.0, %v1360
    %v1362 = vmul.f32 %v1361, 2.1237322e-06
    %v1363 = vadd.f32 %v1362, 0.00028619796
    %v1364 = vmul.f32 %v1361, %v1363
    %v1365 = vadd.f32 %v1364, 0.0036580483
    %v1366 = vmul.f32 %v1361, %v1365
    %v1367 = vadd.f32 %v1366, 0.05243302
    %v1368 = vmul.f32 %v1361, %v1367
    %v1369 = vadd.f32 %v1368, 0.18741608
    %v1370 = vmul.f32 %v1361, %v1369
    %v1371 = vadd.f32 %v1370, 1.1283791
    %v1372 = vmul.f32 %v1118, %v1371
    %v1373 = vmul.f32 %v1361, 3.8918573e-05
    %v1374 = vadd.f32 %v1373, 0.001143296
    %v1375 = vmul.f32 %v1361, %v1374
    %v1376 = vadd.f32 %v1375, 0.014752088
    %v1377 = vmul.f32 %v1361, %v1376
    %v1378 = vadd.f32 %v1377, 0.112945676
    %v1379 = vmul.f32 %v1361, %v1378
    %v1380 = vadd.f32 %v1379, 0.4994258
    %v1381 = vmul.f32 %v1361, %v1380
    %v1382 = vadd.f32 %v1381, 1.0
    %v1383 = vrcp.pop %v1382
    %v1384 = vmul.f32 %v1382, %v1383
    %v1385 = vsub.f32 1.0, %v1384
    %v1386 = vmul.f32 %v1383, %v1385
    %v1387 = vadd.f32 %v1383, %v1386
    %vm1388 = vweird.f32 %v1382
    %vm1389 = vweird.f32 %v1383
    %vm1390 = vmor %vm1388, %vm1389
    %v1391 = vsel %vm1390, %v1383, %v1387
    %v1392 = vand.u32 2147483647, %v1382
    %vm1393 = vcmp.eq.f32.partialorder %v1392, 8.507059e+37
    %v1394 = vand.u32 %v1382, 2147483648
    %v1395 = vor.u32 1.1754944e-38, %v1394
    %v1396 = vsel %vm1393, %v1395, %v1391
    %v1397 = vmul.f32 %v1372, %v1396
    %v1398 = vmin.f32 %v1397, 1.0
    %v1399 = vmax.f32 %v1398, -1.0
    %v1400 = vmul.f32 %v1119, %v1119
    %v1401 = vmin.f32 16.0, %v1400
    %v1402 = vmul.f32 %v1401, 2.1237322e-06
    %v1403 = vadd.f32 %v1402, 0.00028619796
    %v1404 = vmul.f32 %v1401, %v1403
    %v1405 = vadd.f32 %v1404, 0.0036580483
    %v1406 = vmul.f32 %v1401, %v1405
    %v1407 = vadd.f32 %v1406, 0.05243302
    %v1408 = vmul.f32 %v1401, %v1407
    %v1409 = vadd.f32 %v1408, 0.18741608
    %v1410 = vmul.f32 %v1401, %v1409
    %v1411 = vadd.f32 %v1410, 1.1283791
    %v1412 = vmul.f32 %v1119, %v1411
    %v1413 = vmul.f32 %v1401, 3.8918573e-05
    %v1414 = vadd.f32 %v1413, 0.001143296
    %v1415 = vmul.f32 %v1401, %v1414
    %v1416 = vadd.f32 %v1415, 0.014752088
    %v1417 = vmul.f32 %v1401, %v1416
    %v1418 = vadd.f32 %v1417, 0.112945676
    %v1419 = vmul.f32 %v1401, %v1418
    %v1420 = vadd.f32 %v1419, 0.4994258
    %v1421 = vmul.f32 %v1401, %v1420
    %v1422 = vadd.f32 %v1421, 1.0
    %v1423 = vrcp.pop %v1422
    %v1424 = vmul.f32 %v1422, %v1423
    %v1425 = vsub.f32 1.0, %v1424
    %v1426 = vmul.f32 %v1423, %v1425
    %v1427 = vadd.f32 %v1423, %v1426
    %vm1428 = vweird.f32 %v1422
    %vm1429 = vweird.f32 %v1423
    %vm1430 = vmor %vm1428, %vm1429
    %v1431 = vsel %vm1430, %v1423, %v1427
    %v1432 = vand.u32 2147483647, %v1422
    %vm1433 = vcmp.eq.f32.partialorder %v1432, 8.507059e+37
    %v1434 = vand.u32 %v1422, 2147483648
    %v1435 = vor.u32 1.1754944e-38, %v1434
    %v1436 = vsel %vm1433, %v1435, %v1431
    %v1437 = vmul.f32 %v1412, %v1436
    %v1438 = vmin.f32 %v1437, 1.0
    %v1439 = vmax.f32 %v1438, -1.0
    %v1440 = vadd.f32 %v1159, 1.0
    %v1441 = vadd.f32 %v1199, 1.0
    %v1442 = vadd.f32 %v1239, 1.0
    %v1443 = vadd.f32 %v1279, 1.0
    %v1444 = vadd.f32 %v1319, 1.0
    %v1445 = vadd.f32 %v1359, 1.0
    %v1446 = vadd.f32 %v1399, 1.0
    %v1447 = vadd.f32 %v1439, 1.0
    %v1448 = vmul.f32 %v1104, %v1440
    %v1449 = vmul.f32 %v1105, %v1441
    %v1450 = vmul.f32 %v1106, %v1442
    %v1451 = vmul.f32 %v1107, %v1443
    %v1452 = vmul.f32 %v1108, %v1444
    %v1453 = vmul.f32 %v1109, %v1445
    %v1454 = vmul.f32 %v1110, %v1446
    %v1455 = vmul.f32 %v1111, %v1447
    %v1456 = vld [vmem:[%s5] sm:$0x1]
    %v1457 = vld [vmem:[#allocation2] sm:$0x1]
    %1459 = vset.pattern.permute.xlu0 0
    %1460 = vperm.xlu0 %1459, %v1457
    %v1461 = vpop.permute.xlu0 %1460
    %v1463 = vperm.slane %v1461, 0
    %v1465 = vsel %vm563, %v1456, 0
    %1467 = vmatpush.msra.mxu0 0.0
    %1468 = vmatpush.msra.mxu0 0.0
    %1469 = vmatpush.msra.mxu0 0.0
    %1470 = vmatpush.msra.mxu0 0.0
    %1471 = vmatpush.msra.mxu0 0.0
    %1472 = vmatpush.msra.mxu0 0.0
    %1473 = vmatpush.msra.mxu0 0.0
    %1474 = vmatpush.msra.mxu0 0.0
    %1475 = vmatpush.msra.mxu0 %v1455
    %1476 = vmatpush.msra.mxu0 %v1454
    %1477 = vmatpush.msra.mxu0 %v1453
    %1478 = vmatpush.msra.mxu0 %v1452
    %1479 = vmatpush.msra.mxu0 %v1451
    %1480 = vmatpush.msra.mxu0 %v1450
    %1481 = vmatpush.msra.mxu0 %v1449
    %1482 = vmatpush.msra.mxu0 %v1448
    %1483 = vmatmul.f32.gmra.mxu0 %v1465
    %v1484 = vpop.f32.mrf.mxu0
    %v1485 = vadd.f32 %v1463, %v1484
    %1486 = vdwg.mxu0
    %vm1487 = vcmask 57344
    %1488 = vst.msk [vmem:[#allocation3] sm:$0x1] %vm1487, %v1485
    // Predicated region
    $region30: #{_forward_impl.1} parent=1 // pred_check
      _
    $region31: #{_forward_impl.1} parent=1 // pred_check_branch
      %1490 = sbr.rel (0) target = $region33
    $region32: #{_forward_impl.1} parent=1 // pred_region
      %1492 = vsyncadd [#allocation4], 0
      %s1494 = sshll.u32 [#allocation3], 4
      %s1495 = int_to_ptr.vmem [resolvable:$true] %s1494
      %s1496 = sshll.u32 %s7, 4
      %s1497 = int_to_ptr.hbm [resolvable:$true] %s1496
      %1499 = dma.vmem_to_hbm [thread:$0]  %s1495, 16, %s1497, [#allocation4]
    $region33: #{_forward_impl.1} parent=1 // pred_fallthru
      _
    // Predicated region
    $region34: #{_forward_impl.1} parent=1 // pred_check
      _
    $region35: #{_forward_impl.1} parent=1 // pred_check_branch
      %1501 = sbr.rel (0) target = $region37
    $region36: #{_forward_impl.1} parent=1 // pred_region
      %1503 = dma.done [#allocation4], 16
    $region37: #{_forward_impl.1} parent=1 // pred_fallthru
      _
    %1504 = vsyncpa [#allocation4], 1

</llo_original>
